<compile_context>
chip_gen: v5e
topology: v5e:2x2
jax: 0.10.0
libtpu: 0.0.40
codegen_flags: <defaults>
</compile_context>

<pallas_src>
from typing import NamedTuple

import jax
import jax.numpy as jnp
from jax.experimental import pallas as pl
from jax.experimental.pallas import tpu as pltpu

HEAD_PAD = 128            # padded output width of the final Linear(H, 1) head
_MIB = 1024 * 1024
_LEAK = 0.2


def _round_up(x, m):
    return ((x + m - 1) // m) * m


def _vmem_capacity_bytes():
    """Per-TensorCore VMEM capacity; conservative fallback if the query fails."""
    try:
        return int(pltpu.get_tpu_info().vmem_capacity_bytes)
    except Exception:
        return 64 * _MIB  # v7x per-TC size: safe lower bound everywhere


# ----------------------------------------------------------------------------
# Kernels
# ----------------------------------------------------------------------------
def _mlp_tail(h1_pre, b1_ref, w2_ref, b2_ref, w3_ref, b3_ref, o_ref):
    """bias + LeakyReLU -> layer 2 -> LeakyReLU -> padded head -> sigmoid."""
    h1 = h1_pre + b1_ref[...]
    h1 = jnp.where(h1 > 0, h1, _LEAK * h1)

    h2 = jnp.dot(h1.astype(jnp.bfloat16), w2_ref[...],
                 preferred_element_type=jnp.float32)
    h2 = h2 + b2_ref[...]
    h2 = jnp.where(h2 > 0, h2, _LEAK * h2)

    logits = jnp.dot(h2.astype(jnp.bfloat16), w3_ref[...],
                     preferred_element_type=jnp.float32)
    logits = logits + b3_ref[...]
    o_ref[...] = jax.nn.sigmoid(logits).astype(o_ref.dtype)


def _kernel_fused(x_ref, w1_ref, b1_ref, w2_ref, b2_ref, w3_ref, b3_ref, o_ref):
    # Whole layer-1 weight resident: single matmul per batch tile.
    h1 = jnp.dot(x_ref[...], w1_ref[...], preferred_element_type=jnp.float32)
    _mlp_tail(h1, b1_ref, w2_ref, b2_ref, w3_ref, b3_ref, o_ref)


def _kernel_ktiled(x_ref, w1_ref, b1_ref, w2_ref, b2_ref, w3_ref, b3_ref,
                   o_ref, acc_ref):
    # Layer-1 contraction tiled over grid axis 1 (reduction-last, "arbitrary").
    k = pl.program_id(1)

    @pl.when(k == 0)
    def _():
        acc_ref[...] = jnp.zeros_like(acc_ref)

    acc_ref[...] += jnp.dot(x_ref[...], w1_ref[...],
                            preferred_element_type=jnp.float32)

    @pl.when(k == pl.num_programs(1) - 1)
    def _():
        _mlp_tail(acc_ref[...], b1_ref, w2_ref, b2_ref, w3_ref, b3_ref, o_ref)


# ----------------------------------------------------------------------------
# One-time parameter preparation (hoisted out of the per-call path)
# ----------------------------------------------------------------------------
class PreparedParams(NamedTuple):
    w1: jax.Array      # (D_pad, H_pad)    bf16
    b1: jax.Array      # (1, H_pad)        f32
    w2: jax.Array      # (H_pad, H_pad)    bf16
    b2: jax.Array      # (1, H_pad)        f32
    w3: jax.Array      # (H_pad, HEAD_PAD) bf16
    b3: jax.Array      # (1, HEAD_PAD)     f32
    D: int
    D_pad: int
    H: int
    H_pad: int
    TK: int            # layer-1 contraction tile (== D_pad when num_k == 1)
    num_k: int
    vmem_cap: int
    vmem_limit: int


def prepare_params(params, force_k_tiles=None):
    """Pad to (8,128)-friendly shapes and cast weights to bf16 ONCE."""
    w1, b1, w2, b2, w3, b3 = params
    D, H = int(w1.shape[0]), int(w1.shape[1])

    vmem_cap = _vmem_capacity_bytes()
    # 64 MiB scoped limit on 128-MiB parts (v5e/v6e), ~48 MiB on v7x.
    vmem_limit = min(64 * _MIB, (vmem_cap * 3) // 4)

    H_pad = _round_up(H, 128)
    D_pad0 = _round_up(D, 128)

    # Keep all of w1 VMEM-resident unless it would eat the VMEM budget
    # (large flattened image inputs on 64-MiB v7x) -- then K-tile layer 1.
    if force_k_tiles is not None:
        num_k = int(force_k_tiles)
        TK = _round_up(-(-D_pad0 // num_k), 128)
        D_pad = TK * num_k
    elif D_pad0 * H_pad * 2 <= vmem_limit // 3:
        TK, D_pad, num_k = D_pad0, D_pad0, 1
    else:
        TK = max(128, ((vmem_limit // 6) // (2 * H_pad)) // 128 * 128)
        D_pad = _round_up(D, TK)
        num_k = D_pad // TK

    def pad2(a, rows, cols, dtype):
        a = a.astype(dtype)
        return jnp.pad(a, ((0, rows - a.shape[0]), (0, cols - a.shape[1])))

    return PreparedParams(
        w1=pad2(w1, D_pad, H_pad, jnp.bfloat16),
        b1=pad2(b1.reshape(1, -1), 1, H_pad, jnp.float32),
        w2=pad2(w2, H_pad, H_pad, jnp.bfloat16),
        b2=pad2(b2.reshape(1, -1), 1, H_pad, jnp.float32),
        w3=pad2(w3, H_pad, HEAD_PAD, jnp.bfloat16),
        b3=pad2(b3.reshape(1, -1), 1, HEAD_PAD, jnp.float32),
        D=D, D_pad=D_pad, H=H, H_pad=H_pad, TK=TK, num_k=num_k,
        vmem_cap=vmem_cap, vmem_limit=vmem_limit,
    )


# ----------------------------------------------------------------------------
# Tile-size policy (generation-aware) and VMEM budgeting
# ----------------------------------------------------------------------------
def _vmem_bytes_estimate(TB, prep):
    w1_bufs = 1 if prep.num_k == 1 else 2
    weights = 2 * (w1_bufs * prep.TK * prep.H_pad
                   + prep.H_pad * prep.H_pad
                   + prep.H_pad * HEAD_PAD)
    biases = 4 * (2 * prep.H_pad + HEAD_PAD)
    x_tiles = 2 * 2 * TB * prep.TK                     # bf16, double-buffered
    out_tiles = 2 * 2 * TB * HEAD_PAD                  # bf16, double-buffered
    acc = 4 * TB * prep.H_pad if prep.num_k > 1 else 0
    live = 2 * 4 * TB * prep.H_pad                     # f32 h1/h2 intermediates
    return weights + biases + x_tiles + out_tiles + acc + live


def _select_tb(B, prep):
    big_vmem = prep.vmem_cap >= 96 * _MIB              # v5e / v6e (128 MiB)
    tb_max = 512 if big_vmem else 256                  # v7x: smaller tiles
    TB = min(tb_max, _round_up(max(B, 1), 16))         # 16 rows: bf16 packing
    # v7x megacore: keep >= 2 batch tiles so the "parallel" axis has work for
    # both TensorCores (only when the batch is big enough to split).
    if not big_vmem and B >= 32 and _round_up(B, TB) // TB < 2:
        TB = _round_up((B + 1) // 2, 16)
    # Shrink until the estimated footprint fits the scoped VMEM limit.
    while TB > 16 and _vmem_bytes_estimate(TB, prep) > (prep.vmem_limit * 7) // 8:
        TB = max(16, _round_up(TB // 2, 16))
    return TB


# ----------------------------------------------------------------------------
# pallas_call wrapper
# ----------------------------------------------------------------------------
def _build_specs(TB, prep, single_buffer):
    def resident(shape):
        if single_buffer:
            return pl.BlockSpec(shape, lambda i, k: (0, 0),
                                pipeline_mode=pl.Buffered(1))
        return pl.BlockSpec(shape, lambda i, k: (0, 0))

    if prep.num_k == 1:
        w1_spec = resident((prep.TK, prep.H_pad))
    else:
        # K-tiled: w1 block changes with k -> keep default double-buffering.
        w1_spec = pl.BlockSpec((prep.TK, prep.H_pad), lambda i, k: (k, 0))

    in_specs = [
        pl.BlockSpec((TB, prep.TK), lambda i, k: (i, k)),   # x tile
        w1_spec,                                            # w1
        resident((1, prep.H_pad)),                          # b1
        resident((prep.H_pad, prep.H_pad)),                 # w2 (resident)
        resident((1, prep.H_pad)),                          # b2
        resident((prep.H_pad, HEAD_PAD)),                   # w3 (resident)
        resident((1, HEAD_PAD)),                            # b3
    ]
    out_spec = pl.BlockSpec((TB, HEAD_PAD), lambda i, k: (i, 0))
    return in_specs, out_spec


def _run(xp, prep, TB, B_pad, single_buffer):
    grid = (B_pad // TB, prep.num_k)
    in_specs, out_spec = _build_specs(TB, prep, single_buffer)

    if prep.num_k == 1:
        kernel = _kernel_fused
        scratch_shapes = ()
    else:
        kernel = _kernel_ktiled
        scratch_shapes = [pltpu.VMEM((TB, prep.H_pad), jnp.float32)]

    flops = 2 * B_pad * (prep.D_pad * prep.H_pad
                         + prep.H_pad * prep.H_pad
                         + prep.H_pad * HEAD_PAD)
    bytes_accessed = (xp.size * 2
                      + (prep.w1.size + prep.w2.size + prep.w3.size) * 2
                      + (prep.b1.size + prep.b2.size + prep.b3.size) * 4
                      + B_pad * HEAD_PAD * 2)
    cost = pl.CostEstimate(flops=flops, transcendentals=B_pad * HEAD_PAD,
                           bytes_accessed=bytes_accessed)

    return pl.pallas_call(
        kernel,
        out_shape=jax.ShapeDtypeStruct((B_pad, HEAD_PAD), jnp.bfloat16),
        grid=grid,
        in_specs=in_specs,
        out_specs=out_spec,
        scratch_shapes=scratch_shapes,
        compiler_params=pltpu.CompilerParams(
            dimension_semantics=("parallel", "arbitrary"),
            vmem_limit_bytes=prep.vmem_limit,
        ),
        cost_estimate=cost,
    )(xp, prep.w1, prep.b1, prep.w2, prep.b2, prep.w3, prep.b3)


def discriminator_fc(x, prep: PreparedParams):
    """Forward pass. x: (B, ...) -> flattened to (B, D) like nn.Flatten."""
    B = x.shape[0]
    x2d = x.reshape(B, -1)
    assert x2d.shape[1] == prep.D, (x2d.shape, prep.D)

    TB = _select_tb(B, prep)
    B_pad = _round_up(B, TB)
    # Direct bf16 cast + jnp.pad: no intermediate f32 materialization of x.
    xp = jnp.pad(x2d.astype(jnp.bfloat16),
                 ((0, B_pad - B), (0, prep.D_pad - prep.D)))

    try:
        out = _run(xp, prep, TB, B_pad, single_buffer=True)
    except Exception:
        # Portability fallback: some jax builds reject BlockSpec.pipeline_mode;
        # rerun with default double-buffered resident weights.
        out = _run(xp, prep, TB, B_pad, single_buffer=False)

    # Only column 0 of the padded head and the first B rows are real.
    return out[:B, :1].astype(jnp.float32)


# ----------------------------------------------------------------------------
# Synthetic params + pure-JAX reference
# ----------------------------------------------------------------------------
def init_params(key, input_dim, layer_depth):
    """Deterministic synthetic weights. Weights stored as (in, out) = W.T."""
    k1, k2, k3, k4, k5, k6 = jax.random.split(key, 6)

    def lin(kw, kb, fan_in, fan_out):
        bound = 1.0 / jnp.sqrt(fan_in)
        w = jax.random.uniform(kw, (fan_in, fan_out), jnp.float32, -bound, bound)
        b = jax.random.uniform(kb, (1, fan_out), jnp.float32, -bound, bound)
        return w, b

    w1, b1 = lin(k1, k2, input_dim, layer_depth)
    w2, b2 = lin(k3, k4, layer_depth, layer_depth)
    w3, b3 = lin(k5, k6, layer_depth, 1)
    return (w1, b1, w2, b2, w3, b3)


def discriminator_fc_ref(x, params):
    """Pure-JAX f32 reference for correctness checking."""
    B = x.shape[0]
    h = x.reshape(B, -1).astype(jnp.float32)
    w1, b1, w2, b2, w3, b3 = params
    h = h @ w1 + b1
    h = jnp.where(h > 0, h, _LEAK * h)
    h = h @ w2 + b2
    h = jnp.where(h > 0, h, _LEAK * h)
    return jax.nn.sigmoid(h @ w3 + b3)


if __name__ == "__main__":
    key = jax.random.PRNGKey(0)
    kx, kp = jax.random.split(key)

    batch = 2
    input_dim = 5 * 8          # x is (B, 5, 8); Flatten -> 40, pads to 128
    layer_depth = 200          # pads to 256 (exercises H padding like 1000 -> 1024)

    x = jax.random.normal(kx, (batch, 5, 8), dtype=jnp.float32)
    params = init_params(kp, input_dim, layer_depth)
    ref = discriminator_fc_ref(x, params)

    # Default path: whole layer-1 weight VMEM-resident.
    prep = prepare_params(params)
    out = jax.block_until_ready(discriminator_fc(x, prep))
    assert out.shape == (batch, 1), out.shape
    # bf16 matmuls / bf16 output with f32 accumulation -> loosened tolerance.
    assert jnp.allclose(out, ref, atol=2e-2, rtol=2e-2), (out, ref)

    # K-tiled path (guard used for large flattened inputs on 64-MiB-VMEM parts).
    prep_kt = prepare_params(params, force_k_tiles=2)
    out_kt = jax.block_until_ready(discriminator_fc(x, prep_kt))
    assert out_kt.shape == (batch, 1), out_kt.shape
    assert jnp.allclose(out_kt, ref, atol=2e-2, rtol=2e-2), (out_kt, ref)

    print("KERNEL_OK")
</pallas_src>

<mosaic_0001>
module attributes {stable_mosaic.version = 11 : i64} {
  func.func @_kernel_fused(%arg0: i32, %arg1: i32, %arg2: memref<16x128xbf16, #tpu.memory_space<vmem>>, %arg3: memref<128x256xbf16, #tpu.memory_space<vmem>>, %arg4: memref<1x256xf32, #tpu.memory_space<vmem>>, %arg5: memref<256x256xbf16, #tpu.memory_space<vmem>>, %arg6: memref<1x256xf32, #tpu.memory_space<vmem>>, %arg7: memref<256x128xbf16, #tpu.memory_space<vmem>>, %arg8: memref<1x128xf32, #tpu.memory_space<vmem>>, %arg9: memref<16x128xbf16, #tpu.memory_space<vmem>>) attributes {dimension_semantics = [#tpu.dimension_semantics<parallel>, #tpu.dimension_semantics<arbitrary>], iteration_bounds = array<i64: 1, 1>, scalar_prefetch = 0 : i64, scratch_operands = 0 : i64, tpu.core_type = #tpu.core_type<tc>, window_params = [{transform_indices = @transform_0, window_bounds = array<i64: 16, 128>}, {pipeline_mode = #tpu.pipeline_mode<synchronous>, transform_indices = @transform_1, window_bounds = array<i64: 128, 256>}, {pipeline_mode = #tpu.pipeline_mode<synchronous>, transform_indices = @transform_2, window_bounds = array<i64: 1, 256>}, {pipeline_mode = #tpu.pipeline_mode<synchronous>, transform_indices = @transform_3, window_bounds = array<i64: 256, 256>}, {pipeline_mode = #tpu.pipeline_mode<synchronous>, transform_indices = @transform_4, window_bounds = array<i64: 1, 256>}, {pipeline_mode = #tpu.pipeline_mode<synchronous>, transform_indices = @transform_5, window_bounds = array<i64: 256, 128>}, {pipeline_mode = #tpu.pipeline_mode<synchronous>, transform_indices = @transform_6, window_bounds = array<i64: 1, 128>}, {transform_indices = @transform_7, window_bounds = array<i64: 16, 128>}]} {
    %c0 = arith.constant 0 : index
    %c0_0 = arith.constant 0 : index
    %0 = vector.load %arg2[%c0, %c0_0] : memref<16x128xbf16, #tpu.memory_space<vmem>>, vector<16x128xbf16>
    %c0_1 = arith.constant 0 : index
    %c0_2 = arith.constant 0 : index
    %1 = vector.load %arg3[%c0_1, %c0_2] : memref<128x256xbf16, #tpu.memory_space<vmem>>, vector<128x256xbf16>
    %cst = arith.constant dense<0.000000e+00> : vector<16x256xf32>
    %2 = tpu.matmul %0, %1, %cst {dimension_numbers = #tpu.dot_dimension_numbers<[1], [0], [0], [1], [0, 0, 1, 1], [], []>} : vector<16x128xbf16>, vector<128x256xbf16>, vector<16x256xf32> -> vector<16x256xf32>
    %c0_3 = arith.constant 0 : index
    %c0_4 = arith.constant 0 : index
    %3 = vector.load %arg4[%c0_3, %c0_4] : memref<1x256xf32, #tpu.memory_space<vmem>>, vector<1x256xf32>
    %4 = vector.broadcast %3 : vector<1x256xf32> to vector<16x256xf32>
    %5 = arith.addf %2, %4 : vector<16x256xf32>
    %cst_5 = arith.constant 0.000000e+00 : f32
    %6 = vector.broadcast %cst_5 : f32 to vector<16x256xf32>
    %7 = arith.cmpf ogt, %5, %6 : vector<16x256xf32>
    %cst_6 = arith.constant 2.000000e-01 : f32
    %8 = vector.broadcast %cst_6 : f32 to vector<16x256xf32>
    %9 = arith.mulf %8, %5 : vector<16x256xf32>
    %10 = arith.select %7, %5, %9 : vector<16x256xi1>, vector<16x256xf32>
    %11 = arith.truncf %10 : vector<16x256xf32> to vector<16x256xbf16>
    %c0_7 = arith.constant 0 : index
    %c0_8 = arith.constant 0 : index
    %12 = vector.load %arg5[%c0_7, %c0_8] : memref<256x256xbf16, #tpu.memory_space<vmem>>, vector<256x256xbf16>
    %cst_9 = arith.constant dense<0.000000e+00> : vector<16x256xf32>
    %13 = tpu.matmul %11, %12, %cst_9 {dimension_numbers = #tpu.dot_dimension_numbers<[1], [0], [0], [1], [0, 0, 1, 1], [], []>} : vector<16x256xbf16>, vector<256x256xbf16>, vector<16x256xf32> -> vector<16x256xf32>
    %c0_10 = arith.constant 0 : index
    %c0_11 = arith.constant 0 : index
    %14 = vector.load %arg6[%c0_10, %c0_11] : memref<1x256xf32, #tpu.memory_space<vmem>>, vector<1x256xf32>
    %15 = vector.broadcast %14 : vector<1x256xf32> to vector<16x256xf32>
    %16 = arith.addf %13, %15 : vector<16x256xf32>
    %cst_12 = arith.constant 0.000000e+00 : f32
    %17 = vector.broadcast %cst_12 : f32 to vector<16x256xf32>
    %18 = arith.cmpf ogt, %16, %17 : vector<16x256xf32>
    %cst_13 = arith.constant 2.000000e-01 : f32
    %19 = vector.broadcast %cst_13 : f32 to vector<16x256xf32>
    %20 = arith.mulf %19, %16 : vector<16x256xf32>
    %21 = arith.select %18, %16, %20 : vector<16x256xi1>, vector<16x256xf32>
    %22 = arith.truncf %21 : vector<16x256xf32> to vector<16x256xbf16>
    %c0_14 = arith.constant 0 : index
    %c0_15 = arith.constant 0 : index
    %23 = vector.load %arg7[%c0_14, %c0_15] : memref<256x128xbf16, #tpu.memory_space<vmem>>, vector<256x128xbf16>
    %cst_16 = arith.constant dense<0.000000e+00> : vector<16x128xf32>
    %24 = tpu.matmul %22, %23, %cst_16 {dimension_numbers = #tpu.dot_dimension_numbers<[1], [0], [0], [1], [0, 0, 1, 1], [], []>} : vector<16x256xbf16>, vector<256x128xbf16>, vector<16x128xf32> -> vector<16x128xf32>
    %c0_17 = arith.constant 0 : index
    %c0_18 = arith.constant 0 : index
    %25 = vector.load %arg8[%c0_17, %c0_18] : memref<1x128xf32, #tpu.memory_space<vmem>>, vector<1x128xf32>
    %26 = vector.broadcast %25 : vector<1x128xf32> to vector<16x128xf32>
    %27 = arith.addf %24, %26 : vector<16x128xf32>
    %28 = arith.negf %27 : vector<16x128xf32>
    %29 = math.exp %28 : vector<16x128xf32>
    %cst_19 = arith.constant 1.000000e+00 : f32
    %30 = vector.broadcast %cst_19 : f32 to vector<16x128xf32>
    %31 = arith.addf %30, %29 : vector<16x128xf32>
    %32 = arith.divf %30, %31 : vector<16x128xf32>
    %33 = arith.truncf %32 : vector<16x128xf32> to vector<16x128xbf16>
    %c0_20 = arith.constant 0 : index
    %c0_21 = arith.constant 0 : index
    %34 = vector.load %arg9[%c0_20, %c0_21] : memref<16x128xbf16, #tpu.memory_space<vmem>>, vector<16x128xbf16>
    tpu.vector_store %arg9[%c0_20, %c0_21], %33 {strides = array<i32>} : memref<16x128xbf16, #tpu.memory_space<vmem>>, vector<16x128xbf16>,
    return
  }
  func.func @transform_0(%arg0: i32, %arg1: i32) -> (i32, i32) {
    %c0_i32 = arith.constant 0 : i32
    return %arg0, %arg1 : i32, i32
  }
  func.func @transform_1(%arg0: i32, %arg1: i32) -> (i32, i32) {
    %c0_i32 = arith.constant 0 : i32
    %c0_i32_0 = arith.constant 0 : i32
    %c0_i32_1 = arith.constant 0 : i32
    return %c0_i32, %c0_i32_0 : i32, i32
  }
  func.func @transform_2(%arg0: i32, %arg1: i32) -> (i32, i32) {
    %c0_i32 = arith.constant 0 : i32
    %c0_i32_0 = arith.constant 0 : i32
    %c0_i32_1 = arith.constant 0 : i32
    return %c0_i32, %c0_i32_0 : i32, i32
  }
  func.func @transform_3(%arg0: i32, %arg1: i32) -> (i32, i32) {
    %c0_i32 = arith.constant 0 : i32
    %c0_i32_0 = arith.constant 0 : i32
    %c0_i32_1 = arith.constant 0 : i32
    return %c0_i32, %c0_i32_0 : i32, i32
  }
  func.func @transform_4(%arg0: i32, %arg1: i32) -> (i32, i32) {
    %c0_i32 = arith.constant 0 : i32
    %c0_i32_0 = arith.constant 0 : i32
    %c0_i32_1 = arith.constant 0 : i32
    return %c0_i32, %c0_i32_0 : i32, i32
  }
  func.func @transform_5(%arg0: i32, %arg1: i32) -> (i32, i32) {
    %c0_i32 = arith.constant 0 : i32
    %c0_i32_0 = arith.constant 0 : i32
    %c0_i32_1 = arith.constant 0 : i32
    return %c0_i32, %c0_i32_0 : i32, i32
  }
  func.func @transform_6(%arg0: i32, %arg1: i32) -> (i32, i32) {
    %c0_i32 = arith.constant 0 : i32
    %c0_i32_0 = arith.constant 0 : i32
    %c0_i32_1 = arith.constant 0 : i32
    return %c0_i32, %c0_i32_0 : i32, i32
  }
  func.func @transform_7(%arg0: i32, %arg1: i32) -> (i32, i32) {
    %c0_i32 = arith.constant 0 : i32
    %c0_i32_0 = arith.constant 0 : i32
    return %arg0, %c0_i32 : i32, i32
  }
}

module attributes {stable_mosaic.version = 11 : i64} {
  func.func @_kernel_fused(%arg0: i32, %arg1: i32, %arg2: memref<16x128xbf16, #tpu.memory_space<vmem>>, %arg3: memref<128x256xbf16, #tpu.memory_space<vmem>>, %arg4: memref<1x256xf32, #tpu.memory_space<vmem>>, %arg5: memref<256x256xbf16, #tpu.memory_space<vmem>>, %arg6: memref<1x256xf32, #tpu.memory_space<vmem>>, %arg7: memref<256x128xbf16, #tpu.memory_space<vmem>>, %arg8: memref<1x128xf32, #tpu.memory_space<vmem>>, %arg9: memref<16x128xbf16, #tpu.memory_space<vmem>>) attributes {dimension_semantics = [#tpu.dimension_semantics<parallel>, #tpu.dimension_semantics<arbitrary>], iteration_bounds = array<i64: 1, 1>, scalar_prefetch = 0 : i64, scratch_operands = 0 : i64, tpu.core_type = #tpu.core_type<tc>, window_params = [{transform_indices = @transform_0, window_bounds = array<i64: 16, 128>}, {pipeline_mode = #tpu.pipeline_mode<synchronous>, transform_indices = @transform_1, window_bounds = array<i64: 128, 256>}, {pipeline_mode = #tpu.pipeline_mode<synchronous>, transform_indices = @transform_2, window_bounds = array<i64: 1, 256>}, {pipeline_mode = #tpu.pipeline_mode<synchronous>, transform_indices = @transform_3, window_bounds = array<i64: 256, 256>}, {pipeline_mode = #tpu.pipeline_mode<synchronous>, transform_indices = @transform_4, window_bounds = array<i64: 1, 256>}, {pipeline_mode = #tpu.pipeline_mode<synchronous>, transform_indices = @transform_5, window_bounds = array<i64: 256, 128>}, {pipeline_mode = #tpu.pipeline_mode<synchronous>, transform_indices = @transform_6, window_bounds = array<i64: 1, 128>}, {transform_indices = @transform_7, window_bounds = array<i64: 16, 128>}]} {
    %c0 = arith.constant 0 : index
    %c0_0 = arith.constant 0 : index
    %0 = vector.load %arg2[%c0, %c0_0] : memref<16x128xbf16, #tpu.memory_space<vmem>>, vector<16x128xbf16>
    %c0_1 = arith.constant 0 : index
    %c0_2 = arith.constant 0 : index
    %1 = vector.load %arg3[%c0_1, %c0_2] : memref<128x256xbf16, #tpu.memory_space<vmem>>, vector<128x256xbf16>
    %cst = arith.constant dense<0.000000e+00> : vector<16x256xf32>
    %2 = tpu.matmul %0, %1, %cst {dimension_numbers = #tpu.dot_dimension_numbers<[1], [0], [0], [1], [0, 0, 1, 1], [], []>} : vector<16x128xbf16>, vector<128x256xbf16>, vector<16x256xf32> -> vector<16x256xf32>
    %c0_3 = arith.constant 0 : index
    %c0_4 = arith.constant 0 : index
    %3 = vector.load %arg4[%c0_3, %c0_4] : memref<1x256xf32, #tpu.memory_space<vmem>>, vector<1x256xf32>
    %4 = vector.broadcast %3 : vector<1x256xf32> to vector<16x256xf32>
    %5 = arith.addf %2, %4 : vector<16x256xf32>
    %cst_5 = arith.constant 0.000000e+00 : f32
    %6 = vector.broadcast %cst_5 : f32 to vector<16x256xf32>
    %7 = arith.cmpf ogt, %5, %6 : vector<16x256xf32>
    %cst_6 = arith.constant 2.000000e-01 : f32
    %8 = vector.broadcast %cst_6 : f32 to vector<16x256xf32>
    %9 = arith.mulf %8, %5 : vector<16x256xf32>
    %10 = arith.select %7, %5, %9 : vector<16x256xi1>, vector<16x256xf32>
    %11 = arith.truncf %10 : vector<16x256xf32> to vector<16x256xbf16>
    %c0_7 = arith.constant 0 : index
    %c0_8 = arith.constant 0 : index
    %12 = vector.load %arg5[%c0_7, %c0_8] : memref<256x256xbf16, #tpu.memory_space<vmem>>, vector<256x256xbf16>
    %cst_9 = arith.constant dense<0.000000e+00> : vector<16x256xf32>
    %13 = tpu.matmul %11, %12, %cst_9 {dimension_numbers = #tpu.dot_dimension_numbers<[1], [0], [0], [1], [0, 0, 1, 1], [], []>} : vector<16x256xbf16>, vector<256x256xbf16>, vector<16x256xf32> -> vector<16x256xf32>
    %c0_10 = arith.constant 0 : index
    %c0_11 = arith.constant 0 : index
    %14 = vector.load %arg6[%c0_10, %c0_11] : memref<1x256xf32, #tpu.memory_space<vmem>>, vector<1x256xf32>
    %15 = vector.broadcast %14 : vector<1x256xf32> to vector<16x256xf32>
    %16 = arith.addf %13, %15 : vector<16x256xf32>
    %cst_12 = arith.constant 0.000000e+00 : f32
    %17 = vector.broadcast %cst_12 : f32 to vector<16x256xf32>
    %18 = arith.cmpf ogt, %16, %17 : vector<16x256xf32>
    %cst_13 = arith.constant 2.000000e-01 : f32
    %19 = vector.broadcast %cst_13 : f32 to vector<16x256xf32>
    %20 = arith.mulf %19, %16 : vector<16x256xf32>
    %21 = arith.select %18, %16, %20 : vector<16x256xi1>, vector<16x256xf32>
    %22 = arith.truncf %21 : vector<16x256xf32> to vector<16x256xbf16>
    %c0_14 = arith.constant 0 : index
    %c0_15 = arith.constant 0 : index
    %23 = vector.load %arg7[%c0_14, %c0_15] : memref<256x128xbf16, #tpu.memory_space<vmem>>, vector<256x128xbf16>
    %cst_16 = arith.constant dense<0.000000e+00> : vector<16x128xf32>
    %24 = tpu.matmul %22, %23, %cst_16 {dimension_numbers = #tpu.dot_dimension_numbers<[1], [0], [0], [1], [0, 0, 1, 1], [], []>} : vector<16x256xbf16>, vector<256x128xbf16>, vector<16x128xf32> -> vector<16x128xf32>
    %c0_17 = arith.constant 0 : index
    %c0_18 = arith.constant 0 : index
    %25 = vector.load %arg8[%c0_17, %c0_18] : memref<1x128xf32, #tpu.memory_space<vmem>>, vector<1x128xf32>
    %26 = vector.broadcast %25 : vector<1x128xf32> to vector<16x128xf32>
    %27 = arith.addf %24, %26 : vector<16x128xf32>
    %28 = arith.negf %27 : vector<16x128xf32>
    %29 = math.exp %28 : vector<16x128xf32>
    %cst_19 = arith.constant 1.000000e+00 : f32
    %30 = vector.broadcast %cst_19 : f32 to vector<16x128xf32>
    %31 = arith.addf %30, %29 : vector<16x128xf32>
    %32 = arith.divf %30, %31 : vector<16x128xf32>
    %33 = arith.truncf %32 : vector<16x128xf32> to vector<16x128xbf16>
    %c0_20 = arith.constant 0 : index
    %c0_21 = arith.constant 0 : index
    %34 = vector.load %arg9[%c0_20, %c0_21] : memref<16x128xbf16, #tpu.memory_space<vmem>>, vector<16x128xbf16>
    tpu.vector_store %arg9[%c0_20, %c0_21], %33 {strides = array<i32>} : memref<16x128xbf16, #tpu.memory_space<vmem>>, vector<16x128xbf16>,
    return
  }
  func.func @transform_0(%arg0: i32, %arg1: i32) -> (i32, i32) {
    %c0_i32 = arith.constant 0 : i32
    return %arg0, %arg1 : i32, i32
  }
  func.func @transform_1(%arg0: i32, %arg1: i32) -> (i32, i32) {
    %c0_i32 = arith.constant 0 : i32
    %c0_i32_0 = arith.constant 0 : i32
    %c0_i32_1 = arith.constant 0 : i32
    return %c0_i32, %c0_i32_0 : i32, i32
  }
  func.func @transform_2(%arg0: i32, %arg1: i32) -> (i32, i32) {
    %c0_i32 = arith.constant 0 : i32
    %c0_i32_0 = arith.constant 0 : i32
    %c0_i32_1 = arith.constant 0 : i32
    return %c0_i32, %c0_i32_0 : i32, i32
  }
  func.func @transform_3(%arg0: i32, %arg1: i32) -> (i32, i32) {
    %c0_i32 = arith.constant 0 : i32
    %c0_i32_0 = arith.constant 0 : i32
    %c0_i32_1 = arith.constant 0 : i32
    return %c0_i32, %c0_i32_0 : i32, i32
  }
  func.func @transform_4(%arg0: i32, %arg1: i32) -> (i32, i32) {
    %c0_i32 = arith.constant 0 : i32
    %c0_i32_0 = arith.constant 0 : i32
    %c0_i32_1 = arith.constant 0 : i32
    return %c0_i32, %c0_i32_0 : i32, i32
  }
  func.func @transform_5(%arg0: i32, %arg1: i32) -> (i32, i32) {
    %c0_i32 = arith.constant 0 : i32
    %c0_i32_0 = arith.constant 0 : i32
    %c0_i32_1 = arith.constant 0 : i32
    return %c0_i32, %c0_i32_0 : i32, i32
  }
  func.func @transform_6(%arg0: i32, %arg1: i32) -> (i32, i32) {
    %c0_i32 = arith.constant 0 : i32
    %c0_i32_0 = arith.constant 0 : i32
    %c0_i32_1 = arith.constant 0 : i32
    return %c0_i32, %c0_i32_0 : i32, i32
  }
  func.func @transform_7(%arg0: i32, %arg1: i32) -> (i32, i32) {
    %c0_i32 = arith.constant 0 : i32
    %c0_i32_0 = arith.constant 0 : i32
    return %arg0, %c0_i32 : i32, i32
  }
}

</mosaic_0001>

<llo_original>
// kernel: tpu_custom_call.1
$region0: #{tpu_custom_call.1}
  #allocation0 [shape = 'u32[]', space=smem, size = 0x4, offset = 0x4, fixed_abs, tag = 'smem constant byte address 0x4 - core index']
  #allocation1 [shape = 'u32[72,128]{1,0:T(1,128)}', space=vmem, size = 0x9000, scoped, tag = 'internal scratch']
  %s0 = inlined_call_operand.hbm [shape: bf16[16,128], index: 0, kind: input, shape index: {}]
  %s1 = inlined_call_operand.hbm [shape: bf16[128,256], index: 1, kind: input, shape index: {}]
  %s2 = inlined_call_operand.hbm [shape: f32[1,256], index: 2, kind: input, shape index: {}]
  %s3 = inlined_call_operand.hbm [shape: bf16[256,256], index: 3, kind: input, shape index: {}]
  %s4 = inlined_call_operand.vmem [shape: f32[1,256], index: 4, kind: input, shape index: {}]
  %s5 = inlined_call_operand.hbm [shape: bf16[256,128], index: 5, kind: input, shape index: {}]
  %s6 = inlined_call_operand.vmem [shape: f32[1,128], index: 6, kind: input, shape index: {}]
  %s7 = inlined_call_operand.hbm [shape: bf16[16,128], index: 7, kind: output, shape index: {}]
  %s8 = sld [smem:[#allocation0]]
  $region58: #{tpu_custom_call.1} parent=0
    _
  %s10 = ssub.s32 1, %s8
  %s11 = scalar_select 0, %s10, %s8
  $region1: #{tpu_custom_call.1} parent=0
    #allocation2 [shape = 'u8[4096]{0}', space=vmem, size = 0x1000, scoped, tag = 'input window, operand 0, single buffered']
    #allocation3 [shape = 's32[1]{0}', space=sflag, size = 0x4, scoped, tag = 'scoped memory for tpu_custom_call.1']
    #allocation4 [shape = 's32[1]{0}', space=sflag, size = 0x4, scoped, tag = 'scoped memory for tpu_custom_call.1']
    #allocation5 [shape = 'u8[65536]{0}', space=vmem, size = 0x10000, scoped, tag = 'input window, operand 1, single buffered']
    #allocation6 [shape = 's32[1]{0}', space=sflag, size = 0x4, scoped, tag = 'scoped memory for tpu_custom_call.1']
    #allocation7 [shape = 'u8[1024]{0}', space=vmem, size = 0x400, scoped, tag = 'input window, operand 2, single buffered']
    #allocation8 [shape = 'u8[131072]{0}', space=vmem, size = 0x20000, scoped, tag = 'input window, operand 3, single buffered']
    #allocation9 [shape = 's32[1]{0}', space=sflag, size = 0x4, scoped, tag = 'scoped memory for tpu_custom_call.1']
    #allocation10 [shape = 'u8[65536]{0}', space=vmem, size = 0x10000, scoped, tag = 'input window, operand 5, single buffered']
    #allocation11 [shape = 'u8[4096]{0}', space=vmem, size = 0x1000, scoped, tag = 'output window, operand 0, single buffered']
    %12 = vsyncpa [#allocation3], 0
    %13 = vsyncpa [#allocation6], 0
    %14 = vsyncpa [#allocation9], 0
    %15 = vsyncpa [#allocation4], 0
    // Predicated region
    $region2: #{tpu_custom_call.1} parent=1 // pred_check
      _
    $region3: #{tpu_custom_call.1} parent=1 // pred_check_branch
      %17 = sbr.rel (0) target = $region5
    $region4: #{tpu_custom_call.1} parent=1 // pred_region
      %19 = vsyncadd [#allocation3], 0
      %s20 = sshll.u32 %s0, 4
      %s21 = int_to_ptr.hbm [resolvable:$true] %s20
      %s22 = sshll.u32 [#allocation2], 4
      %s23 = int_to_ptr.vmem [resolvable:$true] %s22
      %28 = dma.hbm_to_vmem [thread:$0]  %s21, 128, %s23, [#allocation3], 64, 64, 4
    $region5: #{tpu_custom_call.1} parent=1 // pred_fallthru
      _
    // Predicated region
    $region6: #{tpu_custom_call.1} parent=1 // pred_check
      _
    $region7: #{tpu_custom_call.1} parent=1 // pred_check_branch
      %30 = sbr.rel (0) target = $region9
    $region8: #{tpu_custom_call.1} parent=1 // pred_region
      %32 = vsyncadd [#allocation6], 0
      %s33 = sshll.u32 %s1, 4
      %s34 = int_to_ptr.hbm [resolvable:$true] %s33
      %s35 = sshll.u32 [#allocation5], 4
      %s36 = int_to_ptr.vmem [resolvable:$true] %s35
      %41 = dma.hbm_to_vmem [thread:$0]  %s34, 2048, %s36, [#allocation6], 128, 128, 8
    $region9: #{tpu_custom_call.1} parent=1 // pred_fallthru
      _
    // Predicated region
    $region10: #{tpu_custom_call.1} parent=1 // pred_check
      _
    $region11: #{tpu_custom_call.1} parent=1 // pred_check_branch
      %43 = sbr.rel (0) target = $region13
    $region12: #{tpu_custom_call.1} parent=1 // pred_region
      %45 = vsyncadd [#allocation6], 0
      %s47 = sshll.u32 %s2, 4
      %s48 = int_to_ptr.hbm [resolvable:$true] %s47
      %s49 = sshll.u32 [#allocation7], 4
      %s50 = int_to_ptr.vmem [resolvable:$true] %s49
      %52 = dma.hbm_to_vmem [thread:$0]  %s48, 32, %s50, [#allocation6]
    $region13: #{tpu_custom_call.1} parent=1 // pred_fallthru
      _
    // Predicated region
    $region14: #{tpu_custom_call.1} parent=1 // pred_check
      _
    $region15: #{tpu_custom_call.1} parent=1 // pred_check_branch
      %54 = sbr.rel (0) target = $region17
    $region16: #{tpu_custom_call.1} parent=1 // pred_region
      %56 = vsyncadd [#allocation9], 0
      %s57 = sshll.u32 %s3, 4
      %s58 = int_to_ptr.hbm [resolvable:$true] %s57
      %s59 = sshll.u32 [#allocation8], 4
      %s60 = int_to_ptr.vmem [resolvable:$true] %s59
      %65 = dma.hbm_to_vmem [thread:$0]  %s58, 4096, %s60, [#allocation9], 128, 128, 8
    $region17: #{tpu_custom_call.1} parent=1 // pred_fallthru
      _
    // Predicated region
    $region18: #{tpu_custom_call.1} parent=1 // pred_check
      _
    $region19: #{tpu_custom_call.1} parent=1 // pred_check_branch
      %67 = sbr.rel (0) target = $region21
    $region20: #{tpu_custom_call.1} parent=1 // pred_region
      _
    $region21: #{tpu_custom_call.1} parent=1 // pred_fallthru
      _
    // Predicated region
    $region22: #{tpu_custom_call.1} parent=1 // pred_check
      _
    $region23: #{tpu_custom_call.1} parent=1 // pred_check_branch
      %69 = sbr.rel (0) target = $region25
    $region24: #{tpu_custom_call.1} parent=1 // pred_region
      %71 = vsyncadd [#allocation9], 0
      %s72 = sshll.u32 %s5, 4
      %s73 = int_to_ptr.hbm [resolvable:$true] %s72
      %s74 = sshll.u32 [#allocation10], 4
      %s75 = int_to_ptr.vmem [resolvable:$true] %s74
      %80 = dma.hbm_to_vmem [thread:$0]  %s73, 2048, %s75, [#allocation9], 64, 64, 4
    $region25: #{tpu_custom_call.1} parent=1 // pred_fallthru
      _
    // Predicated region
    $region26: #{tpu_custom_call.1} parent=1 // pred_check
      _
    $region27: #{tpu_custom_call.1} parent=1 // pred_check_branch
      %82 = sbr.rel (0) target = $region29
    $region28: #{tpu_custom_call.1} parent=1 // pred_region
      _
    $region29: #{tpu_custom_call.1} parent=1 // pred_fallthru
      _
    // Predicated region
    $region30: #{tpu_custom_call.1} parent=1 // pred_check
      _
    $region31: #{tpu_custom_call.1} parent=1 // pred_check_branch
      %84 = sbr.rel (0) target = $region33
    $region32: #{tpu_custom_call.1} parent=1 // pred_region
      %86 = dma.done [#allocation3], 128
    $region33: #{tpu_custom_call.1} parent=1 // pred_fallthru
      _
    // Predicated region
    $region34: #{tpu_custom_call.1} parent=1 // pred_check
      _
    $region35: #{tpu_custom_call.1} parent=1 // pred_check_branch
      %88 = sbr.rel (0) target = $region37
    $region36: #{tpu_custom_call.1} parent=1 // pred_region
      %90 = dma.done [#allocation6], 2048
    $region37: #{tpu_custom_call.1} parent=1 // pred_fallthru
      _
    // Predicated region
    $region38: #{tpu_custom_call.1} parent=1 // pred_check
      _
    $region39: #{tpu_custom_call.1} parent=1 // pred_check_branch
      %92 = sbr.rel (0) target = $region41
    $region40: #{tpu_custom_call.1} parent=1 // pred_region
      %94 = dma.done [#allocation6], 32
    $region41: #{tpu_custom_call.1} parent=1 // pred_fallthru
      _
    // Predicated region
    $region42: #{tpu_custom_call.1} parent=1 // pred_check
      _
    $region43: #{tpu_custom_call.1} parent=1 // pred_check_branch
      %96 = sbr.rel (0) target = $region45
    $region44: #{tpu_custom_call.1} parent=1 // pred_region
      %98 = dma.done [#allocation9], 4096
    $region45: #{tpu_custom_call.1} parent=1 // pred_fallthru
      _
    // Predicated region
    $region46: #{tpu_custom_call.1} parent=1 // pred_check
      _
    $region47: #{tpu_custom_call.1} parent=1 // pred_check_branch
      %100 = sbr.rel (0) target = $region49
    $region48: #{tpu_custom_call.1} parent=1 // pred_region
      %102 = dma.done [#allocation9], 2048
    $region49: #{tpu_custom_call.1} parent=1 // pred_fallthru
      _
    %v103 = vld [vmem:[#allocation2] sm:$0xf]
    %v104 = vld [vmem:[#allocation2 + $0x4] sm:$0xf]
    %v105 = vld [vmem:[#allocation5] sm:$0xff]
    %v106 = vld [vmem:[#allocation5 + $0x8] sm:$0xff]
    %v107 = vld [vmem:[#allocation5 + $0x10] sm:$0xff]
    %v108 = vld [vmem:[#allocation5 + $0x18] sm:$0xff]
    %v109 = vld [vmem:[#allocation5 + $0x20] sm:$0xff]
    %v110 = vld [vmem:[#allocation5 + $0x28] sm:$0xff]
    %v111 = vld [vmem:[#allocation5 + $0x30] sm:$0xff]
    %v112 = vld [vmem:[#allocation5 + $0x38] sm:$0xff]
    %v113 = vld [vmem:[#allocation5 + $0x40] sm:$0xff]
    %v114 = vld [vmem:[#allocation5 + $0x48] sm:$0xff]
    %v115 = vld [vmem:[#allocation5 + $0x50] sm:$0xff]
    %v116 = vld [vmem:[#allocation5 + $0x58] sm:$0xff]
    %v117 = vld [vmem:[#allocation5 + $0x60] sm:$0xff]
    %v118 = vld [vmem:[#allocation5 + $0x68] sm:$0xff]
    %v119 = vld [vmem:[#allocation5 + $0x70] sm:$0xff]
    %v120 = vld [vmem:[#allocation5 + $0x78] sm:$0xff]
    %v121 = vld [vmem:[#allocation7] sm:$0x3]
    %v123 = vperm.slane %v121, 0
    %v124 = vperm.slane %v121, 1
    %v129 = vunpack.c.l.b16 %v103
    %v130 = vunpack.c.l.b16 %v104
    %v131 = vpack.c.b16 %v130, %v129
    %v149 = vunpack.c.l.b16 %v105
    %v150 = vunpack.c.h.b16 %v105
    %v151 = vunpack.c.l.b16 %v106
    %v152 = vunpack.c.h.b16 %v106
    %v153 = vunpack.c.l.b16 %v107
    %v154 = vunpack.c.h.b16 %v107
    %v155 = vunpack.c.l.b16 %v108
    %v156 = vunpack.c.h.b16 %v108
    %v157 = vunpack.c.l.b16 %v109
    %v158 = vunpack.c.h.b16 %v109
    %v159 = vunpack.c.l.b16 %v110
    %v160 = vunpack.c.h.b16 %v110
    %v161 = vunpack.c.l.b16 %v111
    %v162 = vunpack.c.h.b16 %v111
    %v163 = vunpack.c.l.b16 %v112
    %v164 = vunpack.c.h.b16 %v112
    %v165 = vunpack.c.l.b16 %v113
    %v166 = vunpack.c.h.b16 %v113
    %v167 = vunpack.c.l.b16 %v114
    %v168 = vunpack.c.h.b16 %v114
    %v169 = vunpack.c.l.b16 %v115
    %v170 = vunpack.c.h.b16 %v115
    %v171 = vunpack.c.l.b16 %v116
    %v172 = vunpack.c.h.b16 %v116
    %v173 = vunpack.c.l.b16 %v117
    %v174 = vunpack.c.h.b16 %v117
    %v175 = vunpack.c.l.b16 %v118
    %v176 = vunpack.c.h.b16 %v118
    %v177 = vunpack.c.l.b16 %v119
    %v178 = vunpack.c.h.b16 %v119
    %v179 = vunpack.c.l.b16 %v120
    %v180 = vunpack.c.h.b16 %v120
    %v181 = vpack.c.b16 %v151, %v149
    %v182 = vpack.c.b16 %v152, %v150
    %v183 = vpack.c.b16 %v155, %v153
    %v184 = vpack.c.b16 %v156, %v154
    %v185 = vpack.c.b16 %v159, %v157
    %v186 = vpack.c.b16 %v160, %v158
    %v187 = vpack.c.b16 %v163, %v161
    %v188 = vpack.c.b16 %v164, %v162
    %v189 = vpack.c.b16 %v167, %v165
    %v190 = vpack.c.b16 %v168, %v166
    %v191 = vpack.c.b16 %v171, %v169
    %v192 = vpack.c.b16 %v172, %v170
    %v193 = vpack.c.b16 %v175, %v173
    %v194 = vpack.c.b16 %v176, %v174
    %v195 = vpack.c.b16 %v179, %v177
    %v196 = vpack.c.b16 %v180, %v178
    %213 = vmatpush.bf16.msra.mxu0 %v195
    %214 = vmatpush.bf16.msra.mxu0 %v193
    %215 = vmatpush.bf16.msra.mxu0 %v191
    %216 = vmatpush.bf16.msra.mxu0 %v189
    %217 = vmatpush.bf16.msra.mxu0 %v187
    %218 = vmatpush.bf16.msra.mxu0 %v185
    %219 = vmatpush.bf16.msra.mxu0 %v183
    %220 = vmatpush.bf16.msra.mxu0 %v181
    %221 = vmatmul.bf16.gmra.mxu0 %v131
    %v222 = vpop.f32.mrf.mxu0
    %v223 = vadd.f32 %v123, %v222
    %v224 = vpop.f32.mrf.mxu0
    %v225 = vadd.f32 %v123, %v224
    %226 = vdwg.mxu0
    %227 = vmatpush.bf16.msra.mxu0 %v196
    %228 = vmatpush.bf16.msra.mxu0 %v194
    %229 = vmatpush.bf16.msra.mxu0 %v192
    %230 = vmatpush.bf16.msra.mxu0 %v190
    %231 = vmatpush.bf16.msra.mxu0 %v188
    %232 = vmatpush.bf16.msra.mxu0 %v186
    %233 = vmatpush.bf16.msra.mxu0 %v184
    %234 = vmatpush.bf16.msra.mxu0 %v182
    %235 = vmatmul.bf16.gmra.mxu0 %v131
    %v236 = vpop.f32.mrf.mxu0
    %v237 = vadd.f32 %v124, %v236
    %v238 = vpop.f32.mrf.mxu0
    %v239 = vadd.f32 %v124, %v238
    %240 = vdwg.mxu0
    %vm241 = vcmp.gt.f32.partialorder %v223, 0.0
    %vm242 = vcmp.gt.f32.partialorder %v237, 0.0
    %vm243 = vcmp.gt.f32.partialorder %v225, 0.0
    %vm244 = vcmp.gt.f32.partialorder %v239, 0.0
    %v245 = vmul.f32 %v223, 0.2
    %v246 = vmul.f32 %v237, 0.2
    %v247 = vmul.f32 %v225, 0.2
    %v248 = vmul.f32 %v239, 0.2
    %v249 = vsel %vm241, %v223, %v245
    %v250 = vsel %vm242, %v237, %v246
    %v251 = vsel %vm243, %v225, %v247
    %v252 = vsel %vm244, %v239, %v248
    %v253 = vpack.c.bf16 %v251, %v249
    %v254 = vpack.c.bf16 %v252, %v250
    %v255 = vld [vmem:[#allocation8] sm:$0xff]
    %v256 = vld [vmem:[#allocation8 + $0x8] sm:$0xff]
    %v257 = vld [vmem:[#allocation8 + $0x10] sm:$0xff]
    %v258 = vld [vmem:[#allocation8 + $0x18] sm:$0xff]
    %v259 = vld [vmem:[#allocation8 + $0x20] sm:$0xff]
    %v260 = vld [vmem:[#allocation8 + $0x28] sm:$0xff]
    %v261 = vld [vmem:[#allocation8 + $0x30] sm:$0xff]
    %v262 = vld [vmem:[#allocation8 + $0x38] sm:$0xff]
    %v263 = vld [vmem:[#allocation8 + $0x40] sm:$0xff]
    %v264 = vld [vmem:[#allocation8 + $0x48] sm:$0xff]
    %v265 = vld [vmem:[#allocation8 + $0x50] sm:$0xff]
    %v266 = vld [vmem:[#allocation8 + $0x58] sm:$0xff]
    %v267 = vld [vmem:[#allocation8 + $0x60] sm:$0xff]
    %v268 = vld [vmem:[#allocation8 + $0x68] sm:$0xff]
    %v269 = vld [vmem:[#allocation8 + $0x70] sm:$0xff]
    %v270 = vld [vmem:[#allocation8 + $0x78] sm:$0xff]
    %v271 = vld [vmem:[#allocation8 + $0x80] sm:$0xff]
    %v272 = vld [vmem:[#allocation8 + $0x88] sm:$0xff]
    %v273 = vld [vmem:[#allocation8 + $0x90] sm:$0xff]
    %v274 = vld [vmem:[#allocation8 + $0x98] sm:$0xff]
    %v275 = vld [vmem:[#allocation8 + $0xa0] sm:$0xff]
    %v276 = vld [vmem:[#allocation8 + $0xa8] sm:$0xff]
    %v277 = vld [vmem:[#allocation8 + $0xb0] sm:$0xff]
    %v278 = vld [vmem:[#allocation8 + $0xb8] sm:$0xff]
    %v279 = vld [vmem:[#allocation8 + $0xc0] sm:$0xff]
    %v280 = vld [vmem:[#allocation8 + $0xc8] sm:$0xff]
    %v281 = vld [vmem:[#allocation8 + $0xd0] sm:$0xff]
    %v282 = vld [vmem:[#allocation8 + $0xd8] sm:$0xff]
    %v283 = vld [vmem:[#allocation8 + $0xe0] sm:$0xff]
    %v284 = vld [vmem:[#allocation8 + $0xe8] sm:$0xff]
    %v285 = vld [vmem:[#allocation8 + $0xf0] sm:$0xff]
    %v286 = vld [vmem:[#allocation8 + $0xf8] sm:$0xff]
    %v287 = vld [vmem:[%s4] sm:$0x3]
    %v289 = vperm.slane %v287, 0
    %v290 = vperm.slane %v287, 1
    %v325 = vunpack.c.l.b16 %v255
    %v326 = vunpack.c.h.b16 %v255
    %v327 = vunpack.c.l.b16 %v256
    %v328 = vunpack.c.h.b16 %v256
    %v329 = vunpack.c.l.b16 %v257
    %v330 = vunpack.c.h.b16 %v257
    %v331 = vunpack.c.l.b16 %v258
    %v332 = vunpack.c.h.b16 %v258
    %v333 = vunpack.c.l.b16 %v259
    %v334 = vunpack.c.h.b16 %v259
    %v335 = vunpack.c.l.b16 %v260
    %v336 = vunpack.c.h.b16 %v260
    %v337 = vunpack.c.l.b16 %v261
    %v338 = vunpack.c.h.b16 %v261
    %v339 = vunpack.c.l.b16 %v262
    %v340 = vunpack.c.h.b16 %v262
    %v341 = vunpack.c.l.b16 %v263
    %v342 = vunpack.c.h.b16 %v263
    %v343 = vunpack.c.l.b16 %v264
    %v344 = vunpack.c.h.b16 %v264
    %v345 = vunpack.c.l.b16 %v265
    %v346 = vunpack.c.h.b16 %v265
    %v347 = vunpack.c.l.b16 %v266
    %v348 = vunpack.c.h.b16 %v266
    %v349 = vunpack.c.l.b16 %v267
    %v350 = vunpack.c.h.b16 %v267
    %v351 = vunpack.c.l.b16 %v268
    %v352 = vunpack.c.h.b16 %v268
    %v353 = vunpack.c.l.b16 %v269
    %v354 = vunpack.c.h.b16 %v269
    %v355 = vunpack.c.l.b16 %v270
    %v356 = vunpack.c.h.b16 %v270
    %v357 = vunpack.c.l.b16 %v271
    %v358 = vunpack.c.h.b16 %v271
    %v359 = vunpack.c.l.b16 %v272
    %v360 = vunpack.c.h.b16 %v272
    %v361 = vunpack.c.l.b16 %v273
    %v362 = vunpack.c.h.b16 %v273
    %v363 = vunpack.c.l.b16 %v274
    %v364 = vunpack.c.h.b16 %v274
    %v365 = vunpack.c.l.b16 %v275
    %v366 = vunpack.c.h.b16 %v275
    %v367 = vunpack.c.l.b16 %v276
    %v368 = vunpack.c.h.b16 %v276
    %v369 = vunpack.c.l.b16 %v277
    %v370 = vunpack.c.h.b16 %v277
    %v371 = vunpack.c.l.b16 %v278
    %v372 = vunpack.c.h.b16 %v278
    %v373 = vunpack.c.l.b16 %v279
    %v374 = vunpack.c.h.b16 %v279
    %v375 = vunpack.c.l.b16 %v280
    %v376 = vunpack.c.h.b16 %v280
    %v377 = vunpack.c.l.b16 %v281
    %v378 = vunpack.c.h.b16 %v281
    %v379 = vunpack.c.l.b16 %v282
    %v380 = vunpack.c.h.b16 %v282
    %v381 = vunpack.c.l.b16 %v283
    %v382 = vunpack.c.h.b16 %v283
    %v383 = vunpack.c.l.b16 %v284
    %v384 = vunpack.c.h.b16 %v284
    %v385 = vunpack.c.l.b16 %v285
    %v386 = vunpack.c.h.b16 %v285
    %v387 = vunpack.c.l.b16 %v286
    %v388 = vunpack.c.h.b16 %v286
    %v389 = vpack.c.b16 %v327, %v325
    %v390 = vpack.c.b16 %v328, %v326
    %v391 = vpack.c.b16 %v331, %v329
    %v392 = vpack.c.b16 %v332, %v330
    %v393 = vpack.c.b16 %v335, %v333
    %v394 = vpack.c.b16 %v336, %v334
    %v395 = vpack.c.b16 %v339, %v337
    %v396 = vpack.c.b16 %v340, %v338
    %v397 = vpack.c.b16 %v343, %v341
    %v398 = vpack.c.b16 %v344, %v342
    %v399 = vpack.c.b16 %v347, %v345
    %v400 = vpack.c.b16 %v348, %v346
    %v401 = vpack.c.b16 %v351, %v349
    %v402 = vpack.c.b16 %v352, %v350
    %v403 = vpack.c.b16 %v355, %v353
    %v404 = vpack.c.b16 %v356, %v354
    %v405 = vpack.c.b16 %v359, %v357
    %v406 = vpack.c.b16 %v360, %v358
    %v407 = vpack.c.b16 %v363, %v361
    %v408 = vpack.c.b16 %v364, %v362
    %v409 = vpack.c.b16 %v367, %v365
    %v410 = vpack.c.b16 %v368, %v366
    %v411 = vpack.c.b16 %v371, %v369
    %v412 = vpack.c.b16 %v372, %v370
    %v413 = vpack.c.b16 %v375, %v373
    %v414 = vpack.c.b16 %v376, %v374
    %v415 = vpack.c.b16 %v379, %v377
    %v416 = vpack.c.b16 %v380, %v378
    %v417 = vpack.c.b16 %v383, %v381
    %v418 = vpack.c.b16 %v384, %v382
    %v419 = vpack.c.b16 %v387, %v385
    %v420 = vpack.c.b16 %v388, %v386
    %453 = vmatpush.bf16.msra.mxu0 %v403
    %454 = vmatpush.bf16.msra.mxu0 %v401
    %455 = vmatpush.bf16.msra.mxu0 %v399
    %456 = vmatpush.bf16.msra.mxu0 %v397
    %457 = vmatpush.bf16.msra.mxu0 %v395
    %458 = vmatpush.bf16.msra.mxu0 %v393
    %459 = vmatpush.bf16.msra.mxu0 %v391
    %460 = vmatpush.bf16.msra.mxu0 %v389
    %461 = vmatmul.bf16.gmra.mxu0 %v253
    %v462 = vpop.f32.mrf.mxu0
    %v463 = vadd.f32 %v289, %v462
    %v464 = vpop.f32.mrf.mxu0
    %v465 = vadd.f32 %v289, %v464
    %466 = vdwg.mxu0
    %467 = vmatpush.bf16.msra.mxu0 %v419
    %468 = vmatpush.bf16.msra.mxu0 %v417
    %469 = vmatpush.bf16.msra.mxu0 %v415
    %470 = vmatpush.bf16.msra.mxu0 %v413
    %471 = vmatpush.bf16.msra.mxu0 %v411
    %472 = vmatpush.bf16.msra.mxu0 %v409
    %473 = vmatpush.bf16.msra.mxu0 %v407
    %474 = vmatpush.bf16.msra.mxu0 %v405
    %475 = vmatmul.bf16.gmra.mxu0 %v254
    %v476 = vpop.f32.mrf.mxu0
    %v477 = vadd.f32 %v463, %v476
    %v478 = vpop.f32.mrf.mxu0
    %v479 = vadd.f32 %v465, %v478
    %480 = vdwg.mxu0
    %481 = vmatpush.bf16.msra.mxu0 %v404
    %482 = vmatpush.bf16.msra.mxu0 %v402
    %483 = vmatpush.bf16.msra.mxu0 %v400
    %484 = vmatpush.bf16.msra.mxu0 %v398
    %485 = vmatpush.bf16.msra.mxu0 %v396
    %486 = vmatpush.bf16.msra.mxu0 %v394
    %487 = vmatpush.bf16.msra.mxu0 %v392
    %488 = vmatpush.bf16.msra.mxu0 %v390
    %489 = vmatmul.bf16.gmra.mxu0 %v253
    %v490 = vpop.f32.mrf.mxu0
    %v491 = vadd.f32 %v290, %v490
    %v492 = vpop.f32.mrf.mxu0
    %v493 = vadd.f32 %v290, %v492
    %494 = vdwg.mxu0
    %495 = vmatpush.bf16.msra.mxu0 %v420
    %496 = vmatpush.bf16.msra.mxu0 %v418
    %497 = vmatpush.bf16.msra.mxu0 %v416
    %498 = vmatpush.bf16.msra.mxu0 %v414
    %499 = vmatpush.bf16.msra.mxu0 %v412
    %500 = vmatpush.bf16.msra.mxu0 %v410
    %501 = vmatpush.bf16.msra.mxu0 %v408
    %502 = vmatpush.bf16.msra.mxu0 %v406
    %503 = vmatmul.bf16.gmra.mxu0 %v254
    %v504 = vpop.f32.mrf.mxu0
    %v505 = vadd.f32 %v491, %v504
    %v506 = vpop.f32.mrf.mxu0
    %v507 = vadd.f32 %v493, %v506
    %508 = vdwg.mxu0
    %vm509 = vcmp.gt.f32.partialorder %v477, 0.0
    %vm510 = vcmp.gt.f32.partialorder %v505, 0.0
    %vm511 = vcmp.gt.f32.partialorder %v479, 0.0
    %vm512 = vcmp.gt.f32.partialorder %v507, 0.0
    %v513 = vmul.f32 %v477, 0.2
    %v514 = vmul.f32 %v505, 0.2
    %v515 = vmul.f32 %v479, 0.2
    %v516 = vmul.f32 %v507, 0.2
    %v517 = vsel %vm509, %v477, %v513
    %v518 = vsel %vm510, %v505, %v514
    %v519 = vsel %vm511, %v479, %v515
    %v520 = vsel %vm512, %v507, %v516
    %v521 = vpack.c.bf16 %v519, %v517
    %v522 = vpack.c.bf16 %v520, %v518
    %v523 = vld [vmem:[#allocation10] sm:$0xf]
    %v524 = vld [vmem:[#allocation10 + $0x4] sm:$0xf]
    %v525 = vld [vmem:[#allocation10 + $0x8] sm:$0xf]
    %v526 = vld [vmem:[#allocation10 + $0xc] sm:$0xf]
    %v527 = vld [vmem:[#allocation10 + $0x10] sm:$0xf]
    %v528 = vld [vmem:[#allocation10 + $0x14] sm:$0xf]
    %v529 = vld [vmem:[#allocation10 + $0x18] sm:$0xf]
    %v530 = vld [vmem:[#allocation10 + $0x1c] sm:$0xf]
    %v531 = vld [vmem:[#allocation10 + $0x20] sm:$0xf]
    %v532 = vld [vmem:[#allocation10 + $0x24] sm:$0xf]
    %v533 = vld [vmem:[#allocation10 + $0x28] sm:$0xf]
    %v534 = vld [vmem:[#allocation10 + $0x2c] sm:$0xf]
    %v535 = vld [vmem:[#allocation10 + $0x30] sm:$0xf]
    %v536 = vld [vmem:[#allocation10 + $0x34] sm:$0xf]
    %v537 = vld [vmem:[#allocation10 + $0x38] sm:$0xf]
    %v538 = vld [vmem:[#allocation10 + $0x3c] sm:$0xf]
    %v539 = vld [vmem:[#allocation10 + $0x40] sm:$0xf]
    %v540 = vld [vmem:[#allocation10 + $0x44] sm:$0xf]
    %v541 = vld [vmem:[#allocation10 + $0x48] sm:$0xf]
    %v542 = vld [vmem:[#allocation10 + $0x4c] sm:$0xf]
    %v543 = vld [vmem:[#allocation10 + $0x50] sm:$0xf]
    %v544 = vld [vmem:[#allocation10 + $0x54] sm:$0xf]
    %v545 = vld [vmem:[#allocation10 + $0x58] sm:$0xf]
    %v546 = vld [vmem:[#allocation10 + $0x5c] sm:$0xf]
    %v547 = vld [vmem:[#allocation10 + $0x60] sm:$0xf]
    %v548 = vld [vmem:[#allocation10 + $0x64] sm:$0xf]
    %v549 = vld [vmem:[#allocation10 + $0x68] sm:$0xf]
    %v550 = vld [vmem:[#allocation10 + $0x6c] sm:$0xf]
    %v551 = vld [vmem:[#allocation10 + $0x70] sm:$0xf]
    %v552 = vld [vmem:[#allocation10 + $0x74] sm:$0xf]
    %v553 = vld [vmem:[#allocation10 + $0x78] sm:$0xf]
    %v554 = vld [vmem:[#allocation10 + $0x7c] sm:$0xf]
    %v555 = vld [vmem:[%s6] sm:$0x1]
    %v557 = vperm.slane %v555, 0
    %v591 = vunpack.c.l.b16 %v523
    %v592 = vunpack.c.l.b16 %v524
    %v593 = vunpack.c.l.b16 %v525
    %v594 = vunpack.c.l.b16 %v526
    %v595 = vunpack.c.l.b16 %v527
    %v596 = vunpack.c.l.b16 %v528
    %v597 = vunpack.c.l.b16 %v529
    %v598 = vunpack.c.l.b16 %v530
    %v599 = vunpack.c.l.b16 %v531
    %v600 = vunpack.c.l.b16 %v532
    %v601 = vunpack.c.l.b16 %v533
    %v602 = vunpack.c.l.b16 %v534
    %v603 = vunpack.c.l.b16 %v535
    %v604 = vunpack.c.l.b16 %v536
    %v605 = vunpack.c.l.b16 %v537
    %v606 = vunpack.c.l.b16 %v538
    %v607 = vunpack.c.l.b16 %v539
    %v608 = vunpack.c.l.b16 %v540
    %v609 = vunpack.c.l.b16 %v541
    %v610 = vunpack.c.l.b16 %v542
    %v611 = vunpack.c.l.b16 %v543
    %v612 = vunpack.c.l.b16 %v544
    %v613 = vunpack.c.l.b16 %v545
    %v614 = vunpack.c.l.b16 %v546
    %v615 = vunpack.c.l.b16 %v547
    %v616 = vunpack.c.l.b16 %v548
    %v617 = vunpack.c.l.b16 %v549
    %v618 = vunpack.c.l.b16 %v550
    %v619 = vunpack.c.l.b16 %v551
    %v620 = vunpack.c.l.b16 %v552
    %v621 = vunpack.c.l.b16 %v553
    %v622 = vunpack.c.l.b16 %v554
    %v623 = vpack.c.b16 %v592, %v591
    %v624 = vpack.c.b16 %v594, %v593
    %v625 = vpack.c.b16 %v596, %v595
    %v626 = vpack.c.b16 %v598, %v597
    %v627 = vpack.c.b16 %v600, %v599
    %v628 = vpack.c.b16 %v602, %v601
    %v629 = vpack.c.b16 %v604, %v603
    %v630 = vpack.c.b16 %v606, %v605
    %v631 = vpack.c.b16 %v608, %v607
    %v632 = vpack.c.b16 %v610, %v609
    %v633 = vpack.c.b16 %v612, %v611
    %v634 = vpack.c.b16 %v614, %v613
    %v635 = vpack.c.b16 %v616, %v615
    %v636 = vpack.c.b16 %v618, %v617
    %v637 = vpack.c.b16 %v620, %v619
    %v638 = vpack.c.b16 %v622, %v621
    %655 = vmatpush.bf16.msra.mxu0 %v630
    %656 = vmatpush.bf16.msra.mxu0 %v629
    %657 = vmatpush.bf16.msra.mxu0 %v628
    %658 = vmatpush.bf16.msra.mxu0 %v627
    %659 = vmatpush.bf16.msra.mxu0 %v626
    %660 = vmatpush.bf16.msra.mxu0 %v625
    %661 = vmatpush.bf16.msra.mxu0 %v624
    %662 = vmatpush.bf16.msra.mxu0 %v623
    %663 = vmatmul.bf16.gmra.mxu0 %v521
    %v664 = vpop.f32.mrf.mxu0
    %v665 = vadd.f32 %v557, %v664
    %v666 = vpop.f32.mrf.mxu0
    %v667 = vadd.f32 %v557, %v666
    %668 = vdwg.mxu0
    %669 = vmatpush.bf16.msra.mxu0 %v638
    %670 = vmatpush.bf16.msra.mxu0 %v637
    %671 = vmatpush.bf16.msra.mxu0 %v636
    %672 = vmatpush.bf16.msra.mxu0 %v635
    %673 = vmatpush.bf16.msra.mxu0 %v634
    %674 = vmatpush.bf16.msra.mxu0 %v633
    %675 = vmatpush.bf16.msra.mxu0 %v632
    %676 = vmatpush.bf16.msra.mxu0 %v631
    %677 = vmatmul.bf16.gmra.mxu0 %v522
    %v678 = vpop.f32.mrf.mxu0
    %v679 = vadd.f32 %v665, %v678
    %v680 = vpop.f32.mrf.mxu0
    %v681 = vadd.f32 %v667, %v680
    %682 = vdwg.mxu0
    %v683 = vxor.u32 %v679, 2147483648
    %v684 = vxor.u32 %v681, 2147483648
    %v685 = vmul.f32 %v683, 1.442695
    %v686 = vpow.pop %v685
    %v687 = vmul.f32 %v684, 1.442695
    %v688 = vpow.pop %v687
    %v689 = vadd.f32 %v686, 1.0
    %v690 = vadd.f32 %v688, 1.0
    %v691 = vrcp.pop %v689
    %v692 = vmul.f32 %v689, %v691
    %v693 = vsub.f32 1.0, %v692
    %v694 = vmul.f32 %v691, %v693
    %v695 = vadd.f32 %v691, %v694
    %vm696 = vweird.f32 %v689
    %vm697 = vweird.f32 %v691
    %vm698 = vmor %vm696, %vm697
    %v699 = vsel %vm698, %v691, %v695
    %v700 = vand.u32 2147483647, %v689
    %vm701 = vcmp.eq.f32.partialorder %v700, 8.507059e+37
    %v702 = vand.u32 %v689, 2147483648
    %v703 = vor.u32 1.1754944e-38, %v702
    %v704 = vsel %vm701, %v703, %v699
    %v705 = vmul.f32 1.0, %v704
    %v706 = vrcp.pop %v690
    %v707 = vmul.f32 %v690, %v706
    %v708 = vsub.f32 1.0, %v707
    %v709 = vmul.f32 %v706, %v708
    %v710 = vadd.f32 %v706, %v709
    %vm711 = vweird.f32 %v690
    %vm712 = vweird.f32 %v706
    %vm713 = vmor %vm711, %vm712
    %v714 = vsel %vm713, %v706, %v710
    %v715 = vand.u32 2147483647, %v690
    %vm716 = vcmp.eq.f32.partialorder %v715, 8.507059e+37
    %v717 = vand.u32 %v690, 2147483648
    %v718 = vor.u32 1.1754944e-38, %v717
    %v719 = vsel %vm716, %v718, %v714
    %v720 = vmul.f32 1.0, %v719
    %v721 = vpack.c.bf16 %v705, %v705
    %v722 = vpack.c.bf16 %v720, %v720
    %723 = vst [vmem:[#allocation11] sm:$0xf] %v721
    %724 = vst [vmem:[#allocation11 + $0x4] sm:$0xf] %v722
    // Predicated region
    $region50: #{tpu_custom_call.1} parent=1 // pred_check
      _
    $region51: #{tpu_custom_call.1} parent=1 // pred_check_branch
      %726 = sbr.rel (0) target = $region53
    $region52: #{tpu_custom_call.1} parent=1 // pred_region
      %728 = vsyncadd [#allocation4], 0
      %s729 = sshll.u32 [#allocation11], 4
      %s730 = int_to_ptr.vmem [resolvable:$true] %s729
      %s731 = sshll.u32 %s7, 4
      %s732 = int_to_ptr.hbm [resolvable:$true] %s731
      %737 = dma.vmem_to_hbm [thread:$0]  %s730, 128, %s732, [#allocation4], 64, 64, 4
    $region53: #{tpu_custom_call.1} parent=1 // pred_fallthru
      _
    // Predicated region
    $region54: #{tpu_custom_call.1} parent=1 // pred_check
      _
    $region55: #{tpu_custom_call.1} parent=1 // pred_check_branch
      %739 = sbr.rel (0) target = $region57
    $region56: #{tpu_custom_call.1} parent=1 // pred_region
      %741 = dma.done [#allocation4], 128
    $region57: #{tpu_custom_call.1} parent=1 // pred_fallthru
      _
    %742 = vsyncpa [#allocation3], 1
    %743 = vsyncpa [#allocation6], 1
    %744 = vsyncpa [#allocation9], 1
    %745 = vsyncpa [#allocation4], 1

// kernel: tpu_custom_call.1
$region0: #{tpu_custom_call.1}
  #allocation0 [shape = 'u32[]', space=smem, size = 0x4, offset = 0x4, fixed_abs, tag = 'smem constant byte address 0x4 - core index']
  #allocation1 [shape = 'u32[72,128]{1,0:T(1,128)}', space=vmem, size = 0x9000, scoped, tag = 'internal scratch']
  %s0 = inlined_call_operand.hbm [shape: bf16[16,128], index: 0, kind: input, shape index: {}]
  %s1 = inlined_call_operand.hbm [shape: bf16[128,256], index: 1, kind: input, shape index: {}]
  %s2 = inlined_call_operand.hbm [shape: f32[1,256], index: 2, kind: input, shape index: {}]
  %s3 = inlined_call_operand.hbm [shape: bf16[256,256], index: 3, kind: input, shape index: {}]
  %s4 = inlined_call_operand.vmem [shape: f32[1,256], index: 4, kind: input, shape index: {}]
  %s5 = inlined_call_operand.hbm [shape: bf16[256,128], index: 5, kind: input, shape index: {}]
  %s6 = inlined_call_operand.vmem [shape: f32[1,128], index: 6, kind: input, shape index: {}]
  %s7 = inlined_call_operand.hbm [shape: bf16[16,128], index: 7, kind: output, shape index: {}]
  %s8 = sld [smem:[#allocation0]]
  $region58: #{tpu_custom_call.1} parent=0
    _
  %s10 = ssub.s32 1, %s8
  %s11 = scalar_select 0, %s10, %s8
  $region1: #{tpu_custom_call.1} parent=0
    #allocation2 [shape = 'u8[4096]{0}', space=vmem, size = 0x1000, scoped, tag = 'input window, operand 0, single buffered']
    #allocation3 [shape = 's32[1]{0}', space=sflag, size = 0x4, scoped, tag = 'scoped memory for tpu_custom_call.1']
    #allocation4 [shape = 's32[1]{0}', space=sflag, size = 0x4, scoped, tag = 'scoped memory for tpu_custom_call.1']
    #allocation5 [shape = 'u8[65536]{0}', space=vmem, size = 0x10000, scoped, tag = 'input window, operand 1, single buffered']
    #allocation6 [shape = 's32[1]{0}', space=sflag, size = 0x4, scoped, tag = 'scoped memory for tpu_custom_call.1']
    #allocation7 [shape = 'u8[1024]{0}', space=vmem, size = 0x400, scoped, tag = 'input window, operand 2, single buffered']
    #allocation8 [shape = 'u8[131072]{0}', space=vmem, size = 0x20000, scoped, tag = 'input window, operand 3, single buffered']
    #allocation9 [shape = 's32[1]{0}', space=sflag, size = 0x4, scoped, tag = 'scoped memory for tpu_custom_call.1']
    #allocation10 [shape = 'u8[65536]{0}', space=vmem, size = 0x10000, scoped, tag = 'input window, operand 5, single buffered']
    #allocation11 [shape = 'u8[4096]{0}', space=vmem, size = 0x1000, scoped, tag = 'output window, operand 0, single buffered']
    %12 = vsyncpa [#allocation3], 0
    %13 = vsyncpa [#allocation6], 0
    %14 = vsyncpa [#allocation9], 0
    %15 = vsyncpa [#allocation4], 0
    // Predicated region
    $region2: #{tpu_custom_call.1} parent=1 // pred_check
      _
    $region3: #{tpu_custom_call.1} parent=1 // pred_check_branch
      %17 = sbr.rel (0) target = $region5
    $region4: #{tpu_custom_call.1} parent=1 // pred_region
      %19 = vsyncadd [#allocation3], 0
      %s20 = sshll.u32 %s0, 4
      %s21 = int_to_ptr.hbm [resolvable:$true] %s20
      %s22 = sshll.u32 [#allocation2], 4
      %s23 = int_to_ptr.vmem [resolvable:$true] %s22
      %28 = dma.hbm_to_vmem [thread:$0]  %s21, 128, %s23, [#allocation3], 64, 64, 4
    $region5: #{tpu_custom_call.1} parent=1 // pred_fallthru
      _
    // Predicated region
    $region6: #{tpu_custom_call.1} parent=1 // pred_check
      _
    $region7: #{tpu_custom_call.1} parent=1 // pred_check_branch
      %30 = sbr.rel (0) target = $region9
    $region8: #{tpu_custom_call.1} parent=1 // pred_region
      %32 = vsyncadd [#allocation6], 0
      %s33 = sshll.u32 %s1, 4
      %s34 = int_to_ptr.hbm [resolvable:$true] %s33
      %s35 = sshll.u32 [#allocation5], 4
      %s36 = int_to_ptr.vmem [resolvable:$true] %s35
      %41 = dma.hbm_to_vmem [thread:$0]  %s34, 2048, %s36, [#allocation6], 128, 128, 8
    $region9: #{tpu_custom_call.1} parent=1 // pred_fallthru
      _
    // Predicated region
    $region10: #{tpu_custom_call.1} parent=1 // pred_check
      _
    $region11: #{tpu_custom_call.1} parent=1 // pred_check_branch
      %43 = sbr.rel (0) target = $region13
    $region12: #{tpu_custom_call.1} parent=1 // pred_region
      %45 = vsyncadd [#allocation6], 0
      %s47 = sshll.u32 %s2, 4
      %s48 = int_to_ptr.hbm [resolvable:$true] %s47
      %s49 = sshll.u32 [#allocation7], 4
      %s50 = int_to_ptr.vmem [resolvable:$true] %s49
      %52 = dma.hbm_to_vmem [thread:$0]  %s48, 32, %s50, [#allocation6]
    $region13: #{tpu_custom_call.1} parent=1 // pred_fallthru
      _
    // Predicated region
    $region14: #{tpu_custom_call.1} parent=1 // pred_check
      _
    $region15: #{tpu_custom_call.1} parent=1 // pred_check_branch
      %54 = sbr.rel (0) target = $region17
    $region16: #{tpu_custom_call.1} parent=1 // pred_region
      %56 = vsyncadd [#allocation9], 0
      %s57 = sshll.u32 %s3, 4
      %s58 = int_to_ptr.hbm [resolvable:$true] %s57
      %s59 = sshll.u32 [#allocation8], 4
      %s60 = int_to_ptr.vmem [resolvable:$true] %s59
      %65 = dma.hbm_to_vmem [thread:$0]  %s58, 4096, %s60, [#allocation9], 128, 128, 8
    $region17: #{tpu_custom_call.1} parent=1 // pred_fallthru
      _
    // Predicated region
    $region18: #{tpu_custom_call.1} parent=1 // pred_check
      _
    $region19: #{tpu_custom_call.1} parent=1 // pred_check_branch
      %67 = sbr.rel (0) target = $region21
    $region20: #{tpu_custom_call.1} parent=1 // pred_region
      _
    $region21: #{tpu_custom_call.1} parent=1 // pred_fallthru
      _
    // Predicated region
    $region22: #{tpu_custom_call.1} parent=1 // pred_check
      _
    $region23: #{tpu_custom_call.1} parent=1 // pred_check_branch
      %69 = sbr.rel (0) target = $region25
    $region24: #{tpu_custom_call.1} parent=1 // pred_region
      %71 = vsyncadd [#allocation9], 0
      %s72 = sshll.u32 %s5, 4
      %s73 = int_to_ptr.hbm [resolvable:$true] %s72
      %s74 = sshll.u32 [#allocation10], 4
      %s75 = int_to_ptr.vmem [resolvable:$true] %s74
      %80 = dma.hbm_to_vmem [thread:$0]  %s73, 2048, %s75, [#allocation9], 64, 64, 4
    $region25: #{tpu_custom_call.1} parent=1 // pred_fallthru
      _
    // Predicated region
    $region26: #{tpu_custom_call.1} parent=1 // pred_check
      _
    $region27: #{tpu_custom_call.1} parent=1 // pred_check_branch
      %82 = sbr.rel (0) target = $region29
    $region28: #{tpu_custom_call.1} parent=1 // pred_region
      _
    $region29: #{tpu_custom_call.1} parent=1 // pred_fallthru
      _
    // Predicated region
    $region30: #{tpu_custom_call.1} parent=1 // pred_check
      _
    $region31: #{tpu_custom_call.1} parent=1 // pred_check_branch
      %84 = sbr.rel (0) target = $region33
    $region32: #{tpu_custom_call.1} parent=1 // pred_region
      %86 = dma.done [#allocation3], 128
    $region33: #{tpu_custom_call.1} parent=1 // pred_fallthru
      _
    // Predicated region
    $region34: #{tpu_custom_call.1} parent=1 // pred_check
      _
    $region35: #{tpu_custom_call.1} parent=1 // pred_check_branch
      %88 = sbr.rel (0) target = $region37
    $region36: #{tpu_custom_call.1} parent=1 // pred_region
      %90 = dma.done [#allocation6], 2048
    $region37: #{tpu_custom_call.1} parent=1 // pred_fallthru
      _
    // Predicated region
    $region38: #{tpu_custom_call.1} parent=1 // pred_check
      _
    $region39: #{tpu_custom_call.1} parent=1 // pred_check_branch
      %92 = sbr.rel (0) target = $region41
    $region40: #{tpu_custom_call.1} parent=1 // pred_region
      %94 = dma.done [#allocation6], 32
    $region41: #{tpu_custom_call.1} parent=1 // pred_fallthru
      _
    // Predicated region
    $region42: #{tpu_custom_call.1} parent=1 // pred_check
      _
    $region43: #{tpu_custom_call.1} parent=1 // pred_check_branch
      %96 = sbr.rel (0) target = $region45
    $region44: #{tpu_custom_call.1} parent=1 // pred_region
      %98 = dma.done [#allocation9], 4096
    $region45: #{tpu_custom_call.1} parent=1 // pred_fallthru
      _
    // Predicated region
    $region46: #{tpu_custom_call.1} parent=1 // pred_check
      _
    $region47: #{tpu_custom_call.1} parent=1 // pred_check_branch
      %100 = sbr.rel (0) target = $region49
    $region48: #{tpu_custom_call.1} parent=1 // pred_region
      %102 = dma.done [#allocation9], 2048
    $region49: #{tpu_custom_call.1} parent=1 // pred_fallthru
      _
    %v103 = vld [vmem:[#allocation2] sm:$0xf]
    %v104 = vld [vmem:[#allocation2 + $0x4] sm:$0xf]
    %v105 = vld [vmem:[#allocation5] sm:$0xff]
    %v106 = vld [vmem:[#allocation5 + $0x8] sm:$0xff]
    %v107 = vld [vmem:[#allocation5 + $0x10] sm:$0xff]
    %v108 = vld [vmem:[#allocation5 + $0x18] sm:$0xff]
    %v109 = vld [vmem:[#allocation5 + $0x20] sm:$0xff]
    %v110 = vld [vmem:[#allocation5 + $0x28] sm:$0xff]
    %v111 = vld [vmem:[#allocation5 + $0x30] sm:$0xff]
    %v112 = vld [vmem:[#allocation5 + $0x38] sm:$0xff]
    %v113 = vld [vmem:[#allocation5 + $0x40] sm:$0xff]
    %v114 = vld [vmem:[#allocation5 + $0x48] sm:$0xff]
    %v115 = vld [vmem:[#allocation5 + $0x50] sm:$0xff]
    %v116 = vld [vmem:[#allocation5 + $0x58] sm:$0xff]
    %v117 = vld [vmem:[#allocation5 + $0x60] sm:$0xff]
    %v118 = vld [vmem:[#allocation5 + $0x68] sm:$0xff]
    %v119 = vld [vmem:[#allocation5 + $0x70] sm:$0xff]
    %v120 = vld [vmem:[#allocation5 + $0x78] sm:$0xff]
    %v121 = vld [vmem:[#allocation7] sm:$0x3]
    %v123 = vperm.slane %v121, 0
    %v124 = vperm.slane %v121, 1
    %v129 = vunpack.c.l.b16 %v103
    %v130 = vunpack.c.l.b16 %v104
    %v131 = vpack.c.b16 %v130, %v129
    %v149 = vunpack.c.l.b16 %v105
    %v150 = vunpack.c.h.b16 %v105
    %v151 = vunpack.c.l.b16 %v106
    %v152 = vunpack.c.h.b16 %v106
    %v153 = vunpack.c.l.b16 %v107
    %v154 = vunpack.c.h.b16 %v107
    %v155 = vunpack.c.l.b16 %v108
    %v156 = vunpack.c.h.b16 %v108
    %v157 = vunpack.c.l.b16 %v109
    %v158 = vunpack.c.h.b16 %v109
    %v159 = vunpack.c.l.b16 %v110
    %v160 = vunpack.c.h.b16 %v110
    %v161 = vunpack.c.l.b16 %v111
    %v162 = vunpack.c.h.b16 %v111
    %v163 = vunpack.c.l.b16 %v112
    %v164 = vunpack.c.h.b16 %v112
    %v165 = vunpack.c.l.b16 %v113
    %v166 = vunpack.c.h.b16 %v113
    %v167 = vunpack.c.l.b16 %v114
    %v168 = vunpack.c.h.b16 %v114
    %v169 = vunpack.c.l.b16 %v115
    %v170 = vunpack.c.h.b16 %v115
    %v171 = vunpack.c.l.b16 %v116
    %v172 = vunpack.c.h.b16 %v116
    %v173 = vunpack.c.l.b16 %v117
    %v174 = vunpack.c.h.b16 %v117
    %v175 = vunpack.c.l.b16 %v118
    %v176 = vunpack.c.h.b16 %v118
    %v177 = vunpack.c.l.b16 %v119
    %v178 = vunpack.c.h.b16 %v119
    %v179 = vunpack.c.l.b16 %v120
    %v180 = vunpack.c.h.b16 %v120
    %v181 = vpack.c.b16 %v151, %v149
    %v182 = vpack.c.b16 %v152, %v150
    %v183 = vpack.c.b16 %v155, %v153
    %v184 = vpack.c.b16 %v156, %v154
    %v185 = vpack.c.b16 %v159, %v157
    %v186 = vpack.c.b16 %v160, %v158
    %v187 = vpack.c.b16 %v163, %v161
    %v188 = vpack.c.b16 %v164, %v162
    %v189 = vpack.c.b16 %v167, %v165
    %v190 = vpack.c.b16 %v168, %v166
    %v191 = vpack.c.b16 %v171, %v169
    %v192 = vpack.c.b16 %v172, %v170
    %v193 = vpack.c.b16 %v175, %v173
    %v194 = vpack.c.b16 %v176, %v174
    %v195 = vpack.c.b16 %v179, %v177
    %v196 = vpack.c.b16 %v180, %v178
    %213 = vmatpush.bf16.msra.mxu0 %v195
    %214 = vmatpush.bf16.msra.mxu0 %v193
    %215 = vmatpush.bf16.msra.mxu0 %v191
    %216 = vmatpush.bf16.msra.mxu0 %v189
    %217 = vmatpush.bf16.msra.mxu0 %v187
    %218 = vmatpush.bf16.msra.mxu0 %v185
    %219 = vmatpush.bf16.msra.mxu0 %v183
    %220 = vmatpush.bf16.msra.mxu0 %v181
    %221 = vmatmul.bf16.gmra.mxu0 %v131
    %v222 = vpop.f32.mrf.mxu0
    %v223 = vadd.f32 %v123, %v222
    %v224 = vpop.f32.mrf.mxu0
    %v225 = vadd.f32 %v123, %v224
    %226 = vdwg.mxu0
    %227 = vmatpush.bf16.msra.mxu0 %v196
    %228 = vmatpush.bf16.msra.mxu0 %v194
    %229 = vmatpush.bf16.msra.mxu0 %v192
    %230 = vmatpush.bf16.msra.mxu0 %v190
    %231 = vmatpush.bf16.msra.mxu0 %v188
    %232 = vmatpush.bf16.msra.mxu0 %v186
    %233 = vmatpush.bf16.msra.mxu0 %v184
    %234 = vmatpush.bf16.msra.mxu0 %v182
    %235 = vmatmul.bf16.gmra.mxu0 %v131
    %v236 = vpop.f32.mrf.mxu0
    %v237 = vadd.f32 %v124, %v236
    %v238 = vpop.f32.mrf.mxu0
    %v239 = vadd.f32 %v124, %v238
    %240 = vdwg.mxu0
    %vm241 = vcmp.gt.f32.partialorder %v223, 0.0
    %vm242 = vcmp.gt.f32.partialorder %v237, 0.0
    %vm243 = vcmp.gt.f32.partialorder %v225, 0.0
    %vm244 = vcmp.gt.f32.partialorder %v239, 0.0
    %v245 = vmul.f32 %v223, 0.2
    %v246 = vmul.f32 %v237, 0.2
    %v247 = vmul.f32 %v225, 0.2
    %v248 = vmul.f32 %v239, 0.2
    %v249 = vsel %vm241, %v223, %v245
    %v250 = vsel %vm242, %v237, %v246
    %v251 = vsel %vm243, %v225, %v247
    %v252 = vsel %vm244, %v239, %v248
    %v253 = vpack.c.bf16 %v251, %v249
    %v254 = vpack.c.bf16 %v252, %v250
    %v255 = vld [vmem:[#allocation8] sm:$0xff]
    %v256 = vld [vmem:[#allocation8 + $0x8] sm:$0xff]
    %v257 = vld [vmem:[#allocation8 + $0x10] sm:$0xff]
    %v258 = vld [vmem:[#allocation8 + $0x18] sm:$0xff]
    %v259 = vld [vmem:[#allocation8 + $0x20] sm:$0xff]
    %v260 = vld [vmem:[#allocation8 + $0x28] sm:$0xff]
    %v261 = vld [vmem:[#allocation8 + $0x30] sm:$0xff]
    %v262 = vld [vmem:[#allocation8 + $0x38] sm:$0xff]
    %v263 = vld [vmem:[#allocation8 + $0x40] sm:$0xff]
    %v264 = vld [vmem:[#allocation8 + $0x48] sm:$0xff]
    %v265 = vld [vmem:[#allocation8 + $0x50] sm:$0xff]
    %v266 = vld [vmem:[#allocation8 + $0x58] sm:$0xff]
    %v267 = vld [vmem:[#allocation8 + $0x60] sm:$0xff]
    %v268 = vld [vmem:[#allocation8 + $0x68] sm:$0xff]
    %v269 = vld [vmem:[#allocation8 + $0x70] sm:$0xff]
    %v270 = vld [vmem:[#allocation8 + $0x78] sm:$0xff]
    %v271 = vld [vmem:[#allocation8 + $0x80] sm:$0xff]
    %v272 = vld [vmem:[#allocation8 + $0x88] sm:$0xff]
    %v273 = vld [vmem:[#allocation8 + $0x90] sm:$0xff]
    %v274 = vld [vmem:[#allocation8 + $0x98] sm:$0xff]
    %v275 = vld [vmem:[#allocation8 + $0xa0] sm:$0xff]
    %v276 = vld [vmem:[#allocation8 + $0xa8] sm:$0xff]
    %v277 = vld [vmem:[#allocation8 + $0xb0] sm:$0xff]
    %v278 = vld [vmem:[#allocation8 + $0xb8] sm:$0xff]
    %v279 = vld [vmem:[#allocation8 + $0xc0] sm:$0xff]
    %v280 = vld [vmem:[#allocation8 + $0xc8] sm:$0xff]
    %v281 = vld [vmem:[#allocation8 + $0xd0] sm:$0xff]
    %v282 = vld [vmem:[#allocation8 + $0xd8] sm:$0xff]
    %v283 = vld [vmem:[#allocation8 + $0xe0] sm:$0xff]
    %v284 = vld [vmem:[#allocation8 + $0xe8] sm:$0xff]
    %v285 = vld [vmem:[#allocation8 + $0xf0] sm:$0xff]
    %v286 = vld [vmem:[#allocation8 + $0xf8] sm:$0xff]
    %v287 = vld [vmem:[%s4] sm:$0x3]
    %v289 = vperm.slane %v287, 0
    %v290 = vperm.slane %v287, 1
    %v325 = vunpack.c.l.b16 %v255
    %v326 = vunpack.c.h.b16 %v255
    %v327 = vunpack.c.l.b16 %v256
    %v328 = vunpack.c.h.b16 %v256
    %v329 = vunpack.c.l.b16 %v257
    %v330 = vunpack.c.h.b16 %v257
    %v331 = vunpack.c.l.b16 %v258
    %v332 = vunpack.c.h.b16 %v258
    %v333 = vunpack.c.l.b16 %v259
    %v334 = vunpack.c.h.b16 %v259
    %v335 = vunpack.c.l.b16 %v260
    %v336 = vunpack.c.h.b16 %v260
    %v337 = vunpack.c.l.b16 %v261
    %v338 = vunpack.c.h.b16 %v261
    %v339 = vunpack.c.l.b16 %v262
    %v340 = vunpack.c.h.b16 %v262
    %v341 = vunpack.c.l.b16 %v263
    %v342 = vunpack.c.h.b16 %v263
    %v343 = vunpack.c.l.b16 %v264
    %v344 = vunpack.c.h.b16 %v264
    %v345 = vunpack.c.l.b16 %v265
    %v346 = vunpack.c.h.b16 %v265
    %v347 = vunpack.c.l.b16 %v266
    %v348 = vunpack.c.h.b16 %v266
    %v349 = vunpack.c.l.b16 %v267
    %v350 = vunpack.c.h.b16 %v267
    %v351 = vunpack.c.l.b16 %v268
    %v352 = vunpack.c.h.b16 %v268
    %v353 = vunpack.c.l.b16 %v269
    %v354 = vunpack.c.h.b16 %v269
    %v355 = vunpack.c.l.b16 %v270
    %v356 = vunpack.c.h.b16 %v270
    %v357 = vunpack.c.l.b16 %v271
    %v358 = vunpack.c.h.b16 %v271
    %v359 = vunpack.c.l.b16 %v272
    %v360 = vunpack.c.h.b16 %v272
    %v361 = vunpack.c.l.b16 %v273
    %v362 = vunpack.c.h.b16 %v273
    %v363 = vunpack.c.l.b16 %v274
    %v364 = vunpack.c.h.b16 %v274
    %v365 = vunpack.c.l.b16 %v275
    %v366 = vunpack.c.h.b16 %v275
    %v367 = vunpack.c.l.b16 %v276
    %v368 = vunpack.c.h.b16 %v276
    %v369 = vunpack.c.l.b16 %v277
    %v370 = vunpack.c.h.b16 %v277
    %v371 = vunpack.c.l.b16 %v278
    %v372 = vunpack.c.h.b16 %v278
    %v373 = vunpack.c.l.b16 %v279
    %v374 = vunpack.c.h.b16 %v279
    %v375 = vunpack.c.l.b16 %v280
    %v376 = vunpack.c.h.b16 %v280
    %v377 = vunpack.c.l.b16 %v281
    %v378 = vunpack.c.h.b16 %v281
    %v379 = vunpack.c.l.b16 %v282
    %v380 = vunpack.c.h.b16 %v282
    %v381 = vunpack.c.l.b16 %v283
    %v382 = vunpack.c.h.b16 %v283
    %v383 = vunpack.c.l.b16 %v284
    %v384 = vunpack.c.h.b16 %v284
    %v385 = vunpack.c.l.b16 %v285
    %v386 = vunpack.c.h.b16 %v285
    %v387 = vunpack.c.l.b16 %v286
    %v388 = vunpack.c.h.b16 %v286
    %v389 = vpack.c.b16 %v327, %v325
    %v390 = vpack.c.b16 %v328, %v326
    %v391 = vpack.c.b16 %v331, %v329
    %v392 = vpack.c.b16 %v332, %v330
    %v393 = vpack.c.b16 %v335, %v333
    %v394 = vpack.c.b16 %v336, %v334
    %v395 = vpack.c.b16 %v339, %v337
    %v396 = vpack.c.b16 %v340, %v338
    %v397 = vpack.c.b16 %v343, %v341
    %v398 = vpack.c.b16 %v344, %v342
    %v399 = vpack.c.b16 %v347, %v345
    %v400 = vpack.c.b16 %v348, %v346
    %v401 = vpack.c.b16 %v351, %v349
    %v402 = vpack.c.b16 %v352, %v350
    %v403 = vpack.c.b16 %v355, %v353
    %v404 = vpack.c.b16 %v356, %v354
    %v405 = vpack.c.b16 %v359, %v357
    %v406 = vpack.c.b16 %v360, %v358
    %v407 = vpack.c.b16 %v363, %v361
    %v408 = vpack.c.b16 %v364, %v362
    %v409 = vpack.c.b16 %v367, %v365
    %v410 = vpack.c.b16 %v368, %v366
    %v411 = vpack.c.b16 %v371, %v369
    %v412 = vpack.c.b16 %v372, %v370
    %v413 = vpack.c.b16 %v375, %v373
    %v414 = vpack.c.b16 %v376, %v374
    %v415 = vpack.c.b16 %v379, %v377
    %v416 = vpack.c.b16 %v380, %v378
    %v417 = vpack.c.b16 %v383, %v381
    %v418 = vpack.c.b16 %v384, %v382
    %v419 = vpack.c.b16 %v387, %v385
    %v420 = vpack.c.b16 %v388, %v386
    %453 = vmatpush.bf16.msra.mxu0 %v403
    %454 = vmatpush.bf16.msra.mxu0 %v401
    %455 = vmatpush.bf16.msra.mxu0 %v399
    %456 = vmatpush.bf16.msra.mxu0 %v397
    %457 = vmatpush.bf16.msra.mxu0 %v395
    %458 = vmatpush.bf16.msra.mxu0 %v393
    %459 = vmatpush.bf16.msra.mxu0 %v391
    %460 = vmatpush.bf16.msra.mxu0 %v389
    %461 = vmatmul.bf16.gmra.mxu0 %v253
    %v462 = vpop.f32.mrf.mxu0
    %v463 = vadd.f32 %v289, %v462
    %v464 = vpop.f32.mrf.mxu0
    %v465 = vadd.f32 %v289, %v464
    %466 = vdwg.mxu0
    %467 = vmatpush.bf16.msra.mxu0 %v419
    %468 = vmatpush.bf16.msra.mxu0 %v417
    %469 = vmatpush.bf16.msra.mxu0 %v415
    %470 = vmatpush.bf16.msra.mxu0 %v413
    %471 = vmatpush.bf16.msra.mxu0 %v411
    %472 = vmatpush.bf16.msra.mxu0 %v409
    %473 = vmatpush.bf16.msra.mxu0 %v407
    %474 = vmatpush.bf16.msra.mxu0 %v405
    %475 = vmatmul.bf16.gmra.mxu0 %v254
    %v476 = vpop.f32.mrf.mxu0
    %v477 = vadd.f32 %v463, %v476
    %v478 = vpop.f32.mrf.mxu0
    %v479 = vadd.f32 %v465, %v478
    %480 = vdwg.mxu0
    %481 = vmatpush.bf16.msra.mxu0 %v404
    %482 = vmatpush.bf16.msra.mxu0 %v402
    %483 = vmatpush.bf16.msra.mxu0 %v400
    %484 = vmatpush.bf16.msra.mxu0 %v398
    %485 = vmatpush.bf16.msra.mxu0 %v396
    %486 = vmatpush.bf16.msra.mxu0 %v394
    %487 = vmatpush.bf16.msra.mxu0 %v392
    %488 = vmatpush.bf16.msra.mxu0 %v390
    %489 = vmatmul.bf16.gmra.mxu0 %v253
    %v490 = vpop.f32.mrf.mxu0
    %v491 = vadd.f32 %v290, %v490
    %v492 = vpop.f32.mrf.mxu0
    %v493 = vadd.f32 %v290, %v492
    %494 = vdwg.mxu0
    %495 = vmatpush.bf16.msra.mxu0 %v420
    %496 = vmatpush.bf16.msra.mxu0 %v418
    %497 = vmatpush.bf16.msra.mxu0 %v416
    %498 = vmatpush.bf16.msra.mxu0 %v414
    %499 = vmatpush.bf16.msra.mxu0 %v412
    %500 = vmatpush.bf16.msra.mxu0 %v410
    %501 = vmatpush.bf16.msra.mxu0 %v408
    %502 = vmatpush.bf16.msra.mxu0 %v406
    %503 = vmatmul.bf16.gmra.mxu0 %v254
    %v504 = vpop.f32.mrf.mxu0
    %v505 = vadd.f32 %v491, %v504
    %v506 = vpop.f32.mrf.mxu0
    %v507 = vadd.f32 %v493, %v506
    %508 = vdwg.mxu0
    %vm509 = vcmp.gt.f32.partialorder %v477, 0.0
    %vm510 = vcmp.gt.f32.partialorder %v505, 0.0
    %vm511 = vcmp.gt.f32.partialorder %v479, 0.0
    %vm512 = vcmp.gt.f32.partialorder %v507, 0.0
    %v513 = vmul.f32 %v477, 0.2
    %v514 = vmul.f32 %v505, 0.2
    %v515 = vmul.f32 %v479, 0.2
    %v516 = vmul.f32 %v507, 0.2
    %v517 = vsel %vm509, %v477, %v513
    %v518 = vsel %vm510, %v505, %v514
    %v519 = vsel %vm511, %v479, %v515
    %v520 = vsel %vm512, %v507, %v516
    %v521 = vpack.c.bf16 %v519, %v517
    %v522 = vpack.c.bf16 %v520, %v518
    %v523 = vld [vmem:[#allocation10] sm:$0xf]
    %v524 = vld [vmem:[#allocation10 + $0x4] sm:$0xf]
    %v525 = vld [vmem:[#allocation10 + $0x8] sm:$0xf]
    %v526 = vld [vmem:[#allocation10 + $0xc] sm:$0xf]
    %v527 = vld [vmem:[#allocation10 + $0x10] sm:$0xf]
    %v528 = vld [vmem:[#allocation10 + $0x14] sm:$0xf]
    %v529 = vld [vmem:[#allocation10 + $0x18] sm:$0xf]
    %v530 = vld [vmem:[#allocation10 + $0x1c] sm:$0xf]
    %v531 = vld [vmem:[#allocation10 + $0x20] sm:$0xf]
    %v532 = vld [vmem:[#allocation10 + $0x24] sm:$0xf]
    %v533 = vld [vmem:[#allocation10 + $0x28] sm:$0xf]
    %v534 = vld [vmem:[#allocation10 + $0x2c] sm:$0xf]
    %v535 = vld [vmem:[#allocation10 + $0x30] sm:$0xf]
    %v536 = vld [vmem:[#allocation10 + $0x34] sm:$0xf]
    %v537 = vld [vmem:[#allocation10 + $0x38] sm:$0xf]
    %v538 = vld [vmem:[#allocation10 + $0x3c] sm:$0xf]
    %v539 = vld [vmem:[#allocation10 + $0x40] sm:$0xf]
    %v540 = vld [vmem:[#allocation10 + $0x44] sm:$0xf]
    %v541 = vld [vmem:[#allocation10 + $0x48] sm:$0xf]
    %v542 = vld [vmem:[#allocation10 + $0x4c] sm:$0xf]
    %v543 = vld [vmem:[#allocation10 + $0x50] sm:$0xf]
    %v544 = vld [vmem:[#allocation10 + $0x54] sm:$0xf]
    %v545 = vld [vmem:[#allocation10 + $0x58] sm:$0xf]
    %v546 = vld [vmem:[#allocation10 + $0x5c] sm:$0xf]
    %v547 = vld [vmem:[#allocation10 + $0x60] sm:$0xf]
    %v548 = vld [vmem:[#allocation10 + $0x64] sm:$0xf]
    %v549 = vld [vmem:[#allocation10 + $0x68] sm:$0xf]
    %v550 = vld [vmem:[#allocation10 + $0x6c] sm:$0xf]
    %v551 = vld [vmem:[#allocation10 + $0x70] sm:$0xf]
    %v552 = vld [vmem:[#allocation10 + $0x74] sm:$0xf]
    %v553 = vld [vmem:[#allocation10 + $0x78] sm:$0xf]
    %v554 = vld [vmem:[#allocation10 + $0x7c] sm:$0xf]
    %v555 = vld [vmem:[%s6] sm:$0x1]
    %v557 = vperm.slane %v555, 0
    %v591 = vunpack.c.l.b16 %v523
    %v592 = vunpack.c.l.b16 %v524
    %v593 = vunpack.c.l.b16 %v525
    %v594 = vunpack.c.l.b16 %v526
    %v595 = vunpack.c.l.b16 %v527
    %v596 = vunpack.c.l.b16 %v528
    %v597 = vunpack.c.l.b16 %v529
    %v598 = vunpack.c.l.b16 %v530
    %v599 = vunpack.c.l.b16 %v531
    %v600 = vunpack.c.l.b16 %v532
    %v601 = vunpack.c.l.b16 %v533
    %v602 = vunpack.c.l.b16 %v534
    %v603 = vunpack.c.l.b16 %v535
    %v604 = vunpack.c.l.b16 %v536
    %v605 = vunpack.c.l.b16 %v537
    %v606 = vunpack.c.l.b16 %v538
    %v607 = vunpack.c.l.b16 %v539
    %v608 = vunpack.c.l.b16 %v540
    %v609 = vunpack.c.l.b16 %v541
    %v610 = vunpack.c.l.b16 %v542
    %v611 = vunpack.c.l.b16 %v543
    %v612 = vunpack.c.l.b16 %v544
    %v613 = vunpack.c.l.b16 %v545
    %v614 = vunpack.c.l.b16 %v546
    %v615 = vunpack.c.l.b16 %v547
    %v616 = vunpack.c.l.b16 %v548
    %v617 = vunpack.c.l.b16 %v549
    %v618 = vunpack.c.l.b16 %v550
    %v619 = vunpack.c.l.b16 %v551
    %v620 = vunpack.c.l.b16 %v552
    %v621 = vunpack.c.l.b16 %v553
    %v622 = vunpack.c.l.b16 %v554
    %v623 = vpack.c.b16 %v592, %v591
    %v624 = vpack.c.b16 %v594, %v593
    %v625 = vpack.c.b16 %v596, %v595
    %v626 = vpack.c.b16 %v598, %v597
    %v627 = vpack.c.b16 %v600, %v599
    %v628 = vpack.c.b16 %v602, %v601
    %v629 = vpack.c.b16 %v604, %v603
    %v630 = vpack.c.b16 %v606, %v605
    %v631 = vpack.c.b16 %v608, %v607
    %v632 = vpack.c.b16 %v610, %v609
    %v633 = vpack.c.b16 %v612, %v611
    %v634 = vpack.c.b16 %v614, %v613
    %v635 = vpack.c.b16 %v616, %v615
    %v636 = vpack.c.b16 %v618, %v617
    %v637 = vpack.c.b16 %v620, %v619
    %v638 = vpack.c.b16 %v622, %v621
    %655 = vmatpush.bf16.msra.mxu0 %v630
    %656 = vmatpush.bf16.msra.mxu0 %v629
    %657 = vmatpush.bf16.msra.mxu0 %v628
    %658 = vmatpush.bf16.msra.mxu0 %v627
    %659 = vmatpush.bf16.msra.mxu0 %v626
    %660 = vmatpush.bf16.msra.mxu0 %v625
    %661 = vmatpush.bf16.msra.mxu0 %v624
    %662 = vmatpush.bf16.msra.mxu0 %v623
    %663 = vmatmul.bf16.gmra.mxu0 %v521
    %v664 = vpop.f32.mrf.mxu0
    %v665 = vadd.f32 %v557, %v664
    %v666 = vpop.f32.mrf.mxu0
    %v667 = vadd.f32 %v557, %v666
    %668 = vdwg.mxu0
    %669 = vmatpush.bf16.msra.mxu0 %v638
    %670 = vmatpush.bf16.msra.mxu0 %v637
    %671 = vmatpush.bf16.msra.mxu0 %v636
    %672 = vmatpush.bf16.msra.mxu0 %v635
    %673 = vmatpush.bf16.msra.mxu0 %v634
    %674 = vmatpush.bf16.msra.mxu0 %v633
    %675 = vmatpush.bf16.msra.mxu0 %v632
    %676 = vmatpush.bf16.msra.mxu0 %v631
    %677 = vmatmul.bf16.gmra.mxu0 %v522
    %v678 = vpop.f32.mrf.mxu0
    %v679 = vadd.f32 %v665, %v678
    %v680 = vpop.f32.mrf.mxu0
    %v681 = vadd.f32 %v667, %v680
    %682 = vdwg.mxu0
    %v683 = vxor.u32 %v679, 2147483648
    %v684 = vxor.u32 %v681, 2147483648
    %v685 = vmul.f32 %v683, 1.442695
    %v686 = vpow.pop %v685
    %v687 = vmul.f32 %v684, 1.442695
    %v688 = vpow.pop %v687
    %v689 = vadd.f32 %v686, 1.0
    %v690 = vadd.f32 %v688, 1.0
    %v691 = vrcp.pop %v689
    %v692 = vmul.f32 %v689, %v691
    %v693 = vsub.f32 1.0, %v692
    %v694 = vmul.f32 %v691, %v693
    %v695 = vadd.f32 %v691, %v694
    %vm696 = vweird.f32 %v689
    %vm697 = vweird.f32 %v691
    %vm698 = vmor %vm696, %vm697
    %v699 = vsel %vm698, %v691, %v695
    %v700 = vand.u32 2147483647, %v689
    %vm701 = vcmp.eq.f32.partialorder %v700, 8.507059e+37
    %v702 = vand.u32 %v689, 2147483648
    %v703 = vor.u32 1.1754944e-38, %v702
    %v704 = vsel %vm701, %v703, %v699
    %v705 = vmul.f32 1.0, %v704
    %v706 = vrcp.pop %v690
    %v707 = vmul.f32 %v690, %v706
    %v708 = vsub.f32 1.0, %v707
    %v709 = vmul.f32 %v706, %v708
    %v710 = vadd.f32 %v706, %v709
    %vm711 = vweird.f32 %v690
    %vm712 = vweird.f32 %v706
    %vm713 = vmor %vm711, %vm712
    %v714 = vsel %vm713, %v706, %v710
    %v715 = vand.u32 2147483647, %v690
    %vm716 = vcmp.eq.f32.partialorder %v715, 8.507059e+37
    %v717 = vand.u32 %v690, 2147483648
    %v718 = vor.u32 1.1754944e-38, %v717
    %v719 = vsel %vm716, %v718, %v714
    %v720 = vmul.f32 1.0, %v719
    %v721 = vpack.c.bf16 %v705, %v705
    %v722 = vpack.c.bf16 %v720, %v720
    %723 = vst [vmem:[#allocation11] sm:$0xf] %v721
    %724 = vst [vmem:[#allocation11 + $0x4] sm:$0xf] %v722
    // Predicated region
    $region50: #{tpu_custom_call.1} parent=1 // pred_check
      _
    $region51: #{tpu_custom_call.1} parent=1 // pred_check_branch
      %726 = sbr.rel (0) target = $region53
    $region52: #{tpu_custom_call.1} parent=1 // pred_region
      %728 = vsyncadd [#allocation4], 0
      %s729 = sshll.u32 [#allocation11], 4
      %s730 = int_to_ptr.vmem [resolvable:$true] %s729
      %s731 = sshll.u32 %s7, 4
      %s732 = int_to_ptr.hbm [resolvable:$true] %s731
      %737 = dma.vmem_to_hbm [thread:$0]  %s730, 128, %s732, [#allocation4], 64, 64, 4
    $region53: #{tpu_custom_call.1} parent=1 // pred_fallthru
      _
    // Predicated region
    $region54: #{tpu_custom_call.1} parent=1 // pred_check
      _
    $region55: #{tpu_custom_call.1} parent=1 // pred_check_branch
      %739 = sbr.rel (0) target = $region57
    $region56: #{tpu_custom_call.1} parent=1 // pred_region
      %741 = dma.done [#allocation4], 128
    $region57: #{tpu_custom_call.1} parent=1 // pred_fallthru
      _
    %742 = vsyncpa [#allocation3], 1
    %743 = vsyncpa [#allocation6], 1
    %744 = vsyncpa [#allocation9], 1
    %745 = vsyncpa [#allocation4], 1

</llo_original>
